<compile_context>
chip_gen: v5e
topology: v5e:2x2
jax: 0.10.0
libtpu: 0.0.40
codegen_flags: <defaults>
</compile_context>

<pallas_src>
import functools

import jax
import jax.numpy as jnp
from jax import lax
from jax.experimental import pallas as pl
from jax.experimental.pallas import tpu as pltpu

KSIZE = 7
PAD = KSIZE // 2
LANES = 128
N_ACC = 4  # partial accumulators to break the serial MAC chain


def _spatial_attention_kernel(w_ref, x_ref, o_ref,
                              sum_ref, max_ref, shift_ref,
                              *, h, w, wp, rs, n_strips):
    # w_ref:     (2*K*K,) f32 SMEM   -- conv weights, avg taps pre-scaled by 1/C
    # x_ref:     (TC, H, W) VMEM     -- unpadded input chunk (batch dim squeezed)
    # o_ref:     (H, WP) VMEM        -- lane-dense output (cols >= W sliced off
    #                                   in the wrapper)
    # sum_ref:   (HP, WP) f32 VMEM   -- padded channel-sum plane (halo = 0)
    # max_ref:   (HP, WP) f32 VMEM   -- padded channel-max plane (halo = 0)
    # shift_ref: (2*K, HP, WP) f32   -- lane-shifted planes, one per (plane,kj)
    c = pl.program_id(1)
    n_c = pl.num_programs(1)

    # ---- fused, single-pass channel reduction over this C chunk ----------
    chunk = x_ref[...]                                    # (TC, H, W), input dtype
    csum = jnp.sum(chunk.astype(jnp.float32), axis=0)     # (H, W) f32 sum
    cmax = jnp.max(chunk, axis=0).astype(jnp.float32)     # max exact in input dtype

    row = pl.ds(PAD, h)       # data lives at rows [PAD, PAD+H)
    col = pl.ds(0, w)         # ... and cols [0, W); halo handled by roll-wrap

    @pl.when(c == 0)
    def _():
        # Zero the halo once per batch element; interior is overwritten below.
        sum_ref[...] = jnp.zeros_like(sum_ref)
        max_ref[...] = jnp.zeros_like(max_ref)
        sum_ref[row, col] = csum
        max_ref[row, col] = cmax

    @pl.when(c > 0)
    def _():
        sum_ref[row, col] = sum_ref[row, col] + csum
        max_ref[row, col] = jnp.maximum(max_ref[row, col], cmax)

    # ---- 7x7 conv + sigmoid on the two reduced planes (last C step) ------
    @pl.when(c == n_c - 1)
    def _():
        # One lane roll per (plane, kj); pin the shifted plane in VMEM so the
        # ki row slices below are cheap sublane-offset loads.
        planes = (sum_ref[...], max_ref[...])
        for p in range(2):
            for kj in range(KSIZE):
                sh = (PAD - kj) % wp
                if sh == 0:
                    shifted = planes[p]
                else:
                    shifted = pltpu.roll(planes[p], shift=sh, axis=1)
                shift_ref[p * KSIZE + kj] = shifted

        def do_strip(s):
            r0 = s * rs
            accs = [jnp.zeros((rs, wp), jnp.float32) for _ in range(N_ACC)]
            t = 0
            for p in range(2):
                for kj in range(KSIZE):
                    for ki in range(KSIZE):
                        wgt = w_ref[p * KSIZE * KSIZE + ki * KSIZE + kj]  # SMEM scalar
                        tap = shift_ref[p * KSIZE + kj, pl.ds(r0 + ki, rs), :]
                        accs[t % N_ACC] = accs[t % N_ACC] + wgt * tap
                        t += 1
            acc = (accs[0] + accs[1]) + (accs[2] + accs[3])
            o_ref[pl.ds(r0, rs), :] = jax.nn.sigmoid(acc).astype(o_ref.dtype)

        if n_strips == 1:
            do_strip(0)
        else:
            pl.loop(0, n_strips)(do_strip)


def _pick_channel_tile(C, H, W, itemsize, budget_bytes=8 * 2**20):
    """Largest divisor of C whose (TC, H, W) block fits the per-buffer budget."""
    per_c = max(1, H * W * itemsize)
    tc = max(1, min(C, budget_bytes // per_c))
    while C % tc:
        tc -= 1
    return tc


def _pick_row_strip(H):
    """Strip rows so per-strip accumulators stay register-resident."""
    if H <= 32:
        return H, 1
    for rs in (32, 16, 8):
        if H % rs == 0:
            return rs, H // rs
    return H, 1   # odd H: fall back to one strip


def spatial_attention(x, conv_weight):
    """x: (B, C, H, W); conv_weight: (1, 2, K, K). Returns (B, 1, H, W)."""
    B, C, H, W = x.shape
    HP = H + 2 * PAD
    WP = pl.cdiv(W + 2 * PAD, LANES) * LANES
    TC = _pick_channel_tile(C, H, W, x.dtype.itemsize)
    n_c = C // TC
    RS, n_strips = _pick_row_strip(H)

    # Fold the mean's 1/C into the avg-channel taps: kernel accumulates the SUM.
    w = conv_weight.reshape(2, KSIZE, KSIZE).astype(jnp.float32)
    w = w.at[0].multiply(1.0 / C)
    w_flat = w.reshape(-1)

    kernel = functools.partial(
        _spatial_attention_kernel,
        h=H, w=W, wp=WP, rs=RS, n_strips=n_strips)

    # Explicit VMEM budget: double-buffered input block + output + scratch.
    itemsize = x.dtype.itemsize
    in_block = TC * H * W * itemsize
    out_block = H * WP * itemsize
    scratch = (2 + 2 * KSIZE) * HP * WP * 4
    est = 2 * in_block + 2 * out_block + scratch
    vmem_limit = min(64 * 2**20, max(32 * 2**20, int(1.5 * est)))

    out_wide = pl.pallas_call(
        kernel,
        out_shape=jax.ShapeDtypeStruct((B, H, WP), x.dtype),
        grid_spec=pltpu.PrefetchScalarGridSpec(
            num_scalar_prefetch=0,
            grid=(B, n_c),                      # batch parallel, C reduction last
            in_specs=[
                pl.BlockSpec(memory_space=pltpu.MemorySpace.SMEM),            # weights
                pl.BlockSpec((None, TC, H, W), lambda b, c: (b, c, 0, 0)),    # x, unpadded
            ],
            out_specs=pl.BlockSpec((None, H, WP), lambda b, c: (b, 0, 0)),
            scratch_shapes=[
                pltpu.VMEM((HP, WP), jnp.float32),              # channel-sum plane
                pltpu.VMEM((HP, WP), jnp.float32),              # channel-max plane
                pltpu.VMEM((2 * KSIZE, HP, WP), jnp.float32),   # lane-shifted planes
            ],
        ),
        compiler_params=pltpu.CompilerParams(
            dimension_semantics=("parallel", "arbitrary"),
            vmem_limit_bytes=vmem_limit,
        ),
    )(w_flat, x)

    # Tiny wrapper-side slice (O(B*H*WP)) drops the lane-padding columns.
    return out_wide[:, :, :W].reshape(B, 1, H, W)


def spatial_attention_ref(x, conv_weight):
    """Pure-JAX reference matching the PyTorch forward."""
    avg_out = jnp.mean(x, axis=1, keepdims=True)
    max_out = jnp.max(x, axis=1, keepdims=True)
    feat = jnp.concatenate([avg_out, max_out], axis=1)      # (B, 2, H, W)
    out = lax.conv_general_dilated(
        feat, conv_weight,
        window_strides=(1, 1),
        padding=[(PAD, PAD), (PAD, PAD)],
        dimension_numbers=("NCHW", "OIHW", "NCHW"),
    )
    return jax.nn.sigmoid(out)


if __name__ == "__main__":
    key = jax.random.PRNGKey(0)
    kx, kw, kx2 = jax.random.split(key, 3)

    # Deterministic conv1 weight, shape (out=1, in=2, K, K), no bias.
    conv_weight = (jax.random.normal(kw, (1, 2, KSIZE, KSIZE), dtype=jnp.float32)
                   * 0.1)

    # Test 1: small f32 demo shape.
    B, C, H, W = 2, 4, 16, 16
    x = jax.random.normal(kx, (B, C, H, W), dtype=jnp.float32)
    out = jax.block_until_ready(spatial_attention(x, conv_weight))
    ref = spatial_attention_ref(x, conv_weight)
    assert out.shape == (B, 1, H, W)
    assert jnp.allclose(out, ref, atol=1e-5, rtol=1e-5), (
        f"max abs err {jnp.max(jnp.abs(out - ref))}")

    # Test 2: bf16 input, W not a multiple of 128, odd C, H not multiple of 8
    # (exercises the WP lane-padding / roll-wrap path and the dtype handling).
    B2, C2, H2, W2 = 2, 3, 12, 130
    x2 = jax.random.normal(kx2, (B2, C2, H2, W2), dtype=jnp.float32).astype(
        jnp.bfloat16)
    out2 = jax.block_until_ready(spatial_attention(x2, conv_weight))
    ref2 = spatial_attention_ref(x2.astype(jnp.float32), conv_weight)
    assert out2.shape == (B2, 1, H2, W2)
    err2 = jnp.max(jnp.abs(out2.astype(jnp.float32) - ref2))
    assert err2 < 1e-2, f"bf16 max abs err {err2}"

    print("KERNEL_OK")
</pallas_src>

<mosaic_0001>
module attributes {stable_mosaic.version = 11 : i64} {
  func.func @_spatial_attention_kernel(%arg0: i32, %arg1: i32, %arg2: memref<98xf32, #tpu.memory_space<smem>>, %arg3: memref<1x4x16x16xf32, #tpu.memory_space<vmem>>, %arg4: memref<1x16x128xf32, #tpu.memory_space<vmem>>, %arg5: memref<22x128xf32, #tpu.memory_space<vmem>>, %arg6: memref<22x128xf32, #tpu.memory_space<vmem>>, %arg7: memref<14x22x128xf32, #tpu.memory_space<vmem>>) attributes {dimension_semantics = [#tpu.dimension_semantics<parallel>, #tpu.dimension_semantics<arbitrary>], iteration_bounds = array<i64: 2, 1>, scalar_prefetch = 0 : i64, scratch_operands = 3 : i64, tpu.core_type = #tpu.core_type<tc>, window_params = [{transform_indices = @transform_0, window_bounds = array<i64: 98>}, {transform_indices = @transform_1, window_bounds = array<i64: 1, 4, 16, 16>}, {transform_indices = @transform_2, window_bounds = array<i64: 1, 16, 128>}]} {
    %c0 = arith.constant 0 : index
    %c0_0 = arith.constant 0 : index
    %c0_1 = arith.constant 0 : index
    %c0_2 = arith.constant 0 : index
    %0 = vector.load %arg3[%c0, %c0_0, %c0_1, %c0_2] : memref<1x4x16x16xf32, #tpu.memory_space<vmem>>, vector<1x4x16x16xf32>
    %1 = vector.shape_cast %0 : vector<1x4x16x16xf32> to vector<4x16x16xf32>
    %cst = arith.constant dense<0.000000e+00> : vector<16x16xf32>
    %2 = vector.multi_reduction <add>, %1, %cst [0] : vector<4x16x16xf32> to vector<16x16xf32>
    %cst_3 = arith.constant dense<0xFF800000> : vector<16x16xf32>
    %3 = vector.multi_reduction <maximumf>, %1, %cst_3 [0] : vector<4x16x16xf32> to vector<16x16xf32>
    %c0_i32 = arith.constant 0 : i32
    %4 = arith.cmpi eq, %arg1, %c0_i32 : i32
    %5 = arith.extui %4 : i1 to i32
    %c0_i32_4 = arith.constant 0 : i32
    %6 = arith.cmpi ne, %5, %c0_i32_4 : i32
    scf.if %6 {
      %cst_9 = arith.constant 0.000000e+00 : f32
      %13 = vector.broadcast %cst_9 : f32 to vector<22x128xf32>
      %c0_10 = arith.constant 0 : index
      %c0_11 = arith.constant 0 : index
      %14 = vector.load %arg5[%c0_10, %c0_11] : memref<22x128xf32, #tpu.memory_space<vmem>>, vector<22x128xf32>
      tpu.vector_store %arg5[%c0_10, %c0_11], %13 {strides = array<i32>} : memref<22x128xf32, #tpu.memory_space<vmem>>, vector<22x128xf32>,
      %cst_12 = arith.constant 0.000000e+00 : f32
      %15 = vector.broadcast %cst_12 : f32 to vector<22x128xf32>
      %c0_13 = arith.constant 0 : index
      %c0_14 = arith.constant 0 : index
      %16 = vector.load %arg6[%c0_13, %c0_14] : memref<22x128xf32, #tpu.memory_space<vmem>>, vector<22x128xf32>
      tpu.vector_store %arg6[%c0_13, %c0_14], %15 {strides = array<i32>} : memref<22x128xf32, #tpu.memory_space<vmem>>, vector<22x128xf32>,
      %c3 = arith.constant 3 : index
      %c0_15 = arith.constant 0 : index
      %17 = vector.load %arg5[%c3, %c0_15] : memref<22x128xf32, #tpu.memory_space<vmem>>, vector<16x16xf32>
      tpu.vector_store %arg5[%c3, %c0_15], %2 {strides = array<i32>} : memref<22x128xf32, #tpu.memory_space<vmem>>, vector<16x16xf32>,
      %c3_16 = arith.constant 3 : index
      %c0_17 = arith.constant 0 : index
      %18 = vector.load %arg6[%c3_16, %c0_17] : memref<22x128xf32, #tpu.memory_space<vmem>>, vector<16x16xf32>
      tpu.vector_store %arg6[%c3_16, %c0_17], %3 {strides = array<i32>} : memref<22x128xf32, #tpu.memory_space<vmem>>, vector<16x16xf32>,
    } else {
    }
    %c0_i32_5 = arith.constant 0 : i32
    %7 = arith.cmpi sgt, %arg1, %c0_i32_5 : i32
    %8 = arith.extui %7 : i1 to i32
    %c0_i32_6 = arith.constant 0 : i32
    %9 = arith.cmpi ne, %8, %c0_i32_6 : i32
    scf.if %9 {
      %c3 = arith.constant 3 : index
      %c0_9 = arith.constant 0 : index
      %13 = vector.load %arg5[%c3, %c0_9] : memref<22x128xf32, #tpu.memory_space<vmem>>, vector<16x16xf32>
      %14 = arith.addf %13, %2 : vector<16x16xf32>
      %c3_10 = arith.constant 3 : index
      %c0_11 = arith.constant 0 : index
      %15 = vector.load %arg5[%c3_10, %c0_11] : memref<22x128xf32, #tpu.memory_space<vmem>>, vector<16x16xf32>
      tpu.vector_store %arg5[%c3_10, %c0_11], %14 {strides = array<i32>} : memref<22x128xf32, #tpu.memory_space<vmem>>, vector<16x16xf32>,
      %c3_12 = arith.constant 3 : index
      %c0_13 = arith.constant 0 : index
      %16 = vector.load %arg6[%c3_12, %c0_13] : memref<22x128xf32, #tpu.memory_space<vmem>>, vector<16x16xf32>
      %17 = arith.maximumf %16, %3 : vector<16x16xf32>
      %c3_14 = arith.constant 3 : index
      %c0_15 = arith.constant 0 : index
      %18 = vector.load %arg6[%c3_14, %c0_15] : memref<22x128xf32, #tpu.memory_space<vmem>>, vector<16x16xf32>
      tpu.vector_store %arg6[%c3_14, %c0_15], %17 {strides = array<i32>} : memref<22x128xf32, #tpu.memory_space<vmem>>, vector<16x16xf32>,
    } else {
    }
    %c0_i32_7 = arith.constant 0 : i32
    %10 = arith.cmpi eq, %arg1, %c0_i32_7 : i32
    %11 = arith.extui %10 : i1 to i32
    %c0_i32_8 = arith.constant 0 : i32
    %12 = arith.cmpi ne, %11, %c0_i32_8 : i32
    scf.if %12 {
      %c0_9 = arith.constant 0 : index
      %c0_10 = arith.constant 0 : index
      %13 = vector.load %arg5[%c0_9, %c0_10] : memref<22x128xf32, #tpu.memory_space<vmem>>, vector<22x128xf32>
      %c0_11 = arith.constant 0 : index
      %c0_12 = arith.constant 0 : index
      %14 = vector.load %arg6[%c0_11, %c0_12] : memref<22x128xf32, #tpu.memory_space<vmem>>, vector<22x128xf32>
      %c3_i32 = arith.constant 3 : i32
      %15 = tpu.dynamic_rotate %13 by %c3_i32 dim 1 : vector<22x128xf32>, i32 -> vector<22x128xf32>
      %c0_13 = arith.constant 0 : index
      %c0_14 = arith.constant 0 : index
      %c0_15 = arith.constant 0 : index
      %16 = vector.load %arg7[%c0_13, %c0_14, %c0_15] : memref<14x22x128xf32, #tpu.memory_space<vmem>>, vector<1x22x128xf32>
      %17 = vector.shape_cast %16 : vector<1x22x128xf32> to vector<22x128xf32>
      %18 = vector.shape_cast %15 : vector<22x128xf32> to vector<1x22x128xf32>
      tpu.vector_store %arg7[%c0_13, %c0_14, %c0_15], %18 {strides = array<i32>} : memref<14x22x128xf32, #tpu.memory_space<vmem>>, vector<1x22x128xf32>,
      %c2_i32 = arith.constant 2 : i32
      %19 = tpu.dynamic_rotate %13 by %c2_i32 dim 1 : vector<22x128xf32>, i32 -> vector<22x128xf32>
      %c1 = arith.constant 1 : index
      %c0_16 = arith.constant 0 : index
      %c0_17 = arith.constant 0 : index
      %20 = vector.load %arg7[%c1, %c0_16, %c0_17] : memref<14x22x128xf32, #tpu.memory_space<vmem>>, vector<1x22x128xf32>
      %21 = vector.shape_cast %20 : vector<1x22x128xf32> to vector<22x128xf32>
      %22 = vector.shape_cast %19 : vector<22x128xf32> to vector<1x22x128xf32>
      tpu.vector_store %arg7[%c1, %c0_16, %c0_17], %22 {strides = array<i32>} : memref<14x22x128xf32, #tpu.memory_space<vmem>>, vector<1x22x128xf32>,
      %c1_i32 = arith.constant 1 : i32
      %23 = tpu.dynamic_rotate %13 by %c1_i32 dim 1 : vector<22x128xf32>, i32 -> vector<22x128xf32>
      %c2 = arith.constant 2 : index
      %c0_18 = arith.constant 0 : index
      %c0_19 = arith.constant 0 : index
      %24 = vector.load %arg7[%c2, %c0_18, %c0_19] : memref<14x22x128xf32, #tpu.memory_space<vmem>>, vector<1x22x128xf32>
      %25 = vector.shape_cast %24 : vector<1x22x128xf32> to vector<22x128xf32>
      %26 = vector.shape_cast %23 : vector<22x128xf32> to vector<1x22x128xf32>
      tpu.vector_store %arg7[%c2, %c0_18, %c0_19], %26 {strides = array<i32>} : memref<14x22x128xf32, #tpu.memory_space<vmem>>, vector<1x22x128xf32>,
      %c3 = arith.constant 3 : index
      %c0_20 = arith.constant 0 : index
      %c0_21 = arith.constant 0 : index
      %27 = vector.load %arg7[%c3, %c0_20, %c0_21] : memref<14x22x128xf32, #tpu.memory_space<vmem>>, vector<1x22x128xf32>
      %28 = vector.shape_cast %27 : vector<1x22x128xf32> to vector<22x128xf32>
      %29 = vector.shape_cast %13 : vector<22x128xf32> to vector<1x22x128xf32>
      tpu.vector_store %arg7[%c3, %c0_20, %c0_21], %29 {strides = array<i32>} : memref<14x22x128xf32, #tpu.memory_space<vmem>>, vector<1x22x128xf32>,
      %c127_i32 = arith.constant 127 : i32
      %30 = tpu.dynamic_rotate %13 by %c127_i32 dim 1 : vector<22x128xf32>, i32 -> vector<22x128xf32>
      %c4 = arith.constant 4 : index
      %c0_22 = arith.constant 0 : index
      %c0_23 = arith.constant 0 : index
      %31 = vector.load %arg7[%c4, %c0_22, %c0_23] : memref<14x22x128xf32, #tpu.memory_space<vmem>>, vector<1x22x128xf32>
      %32 = vector.shape_cast %31 : vector<1x22x128xf32> to vector<22x128xf32>
      %33 = vector.shape_cast %30 : vector<22x128xf32> to vector<1x22x128xf32>
      tpu.vector_store %arg7[%c4, %c0_22, %c0_23], %33 {strides = array<i32>} : memref<14x22x128xf32, #tpu.memory_space<vmem>>, vector<1x22x128xf32>,
      %c126_i32 = arith.constant 126 : i32
      %34 = tpu.dynamic_rotate %13 by %c126_i32 dim 1 : vector<22x128xf32>, i32 -> vector<22x128xf32>
      %c5 = arith.constant 5 : index
      %c0_24 = arith.constant 0 : index
      %c0_25 = arith.constant 0 : index
      %35 = vector.load %arg7[%c5, %c0_24, %c0_25] : memref<14x22x128xf32, #tpu.memory_space<vmem>>, vector<1x22x128xf32>
      %36 = vector.shape_cast %35 : vector<1x22x128xf32> to vector<22x128xf32>
      %37 = vector.shape_cast %34 : vector<22x128xf32> to vector<1x22x128xf32>
      tpu.vector_store %arg7[%c5, %c0_24, %c0_25], %37 {strides = array<i32>} : memref<14x22x128xf32, #tpu.memory_space<vmem>>, vector<1x22x128xf32>,
      %c125_i32 = arith.constant 125 : i32
      %38 = tpu.dynamic_rotate %13 by %c125_i32 dim 1 : vector<22x128xf32>, i32 -> vector<22x128xf32>
      %c6 = arith.constant 6 : index
      %c0_26 = arith.constant 0 : index
      %c0_27 = arith.constant 0 : index
      %39 = vector.load %arg7[%c6, %c0_26, %c0_27] : memref<14x22x128xf32, #tpu.memory_space<vmem>>, vector<1x22x128xf32>
      %40 = vector.shape_cast %39 : vector<1x22x128xf32> to vector<22x128xf32>
      %41 = vector.shape_cast %38 : vector<22x128xf32> to vector<1x22x128xf32>
      tpu.vector_store %arg7[%c6, %c0_26, %c0_27], %41 {strides = array<i32>} : memref<14x22x128xf32, #tpu.memory_space<vmem>>, vector<1x22x128xf32>,
      %c3_i32_28 = arith.constant 3 : i32
      %42 = tpu.dynamic_rotate %14 by %c3_i32_28 dim 1 : vector<22x128xf32>, i32 -> vector<22x128xf32>
      %c7 = arith.constant 7 : index
      %c0_29 = arith.constant 0 : index
      %c0_30 = arith.constant 0 : index
      %43 = vector.load %arg7[%c7, %c0_29, %c0_30] : memref<14x22x128xf32, #tpu.memory_space<vmem>>, vector<1x22x128xf32>
      %44 = vector.shape_cast %43 : vector<1x22x128xf32> to vector<22x128xf32>
      %45 = vector.shape_cast %42 : vector<22x128xf32> to vector<1x22x128xf32>
      tpu.vector_store %arg7[%c7, %c0_29, %c0_30], %45 {strides = array<i32>} : memref<14x22x128xf32, #tpu.memory_space<vmem>>, vector<1x22x128xf32>,
      %c2_i32_31 = arith.constant 2 : i32
      %46 = tpu.dynamic_rotate %14 by %c2_i32_31 dim 1 : vector<22x128xf32>, i32 -> vector<22x128xf32>
      %c8 = arith.constant 8 : index
      %c0_32 = arith.constant 0 : index
      %c0_33 = arith.constant 0 : index
      %47 = vector.load %arg7[%c8, %c0_32, %c0_33] : memref<14x22x128xf32, #tpu.memory_space<vmem>>, vector<1x22x128xf32>
      %48 = vector.shape_cast %47 : vector<1x22x128xf32> to vector<22x128xf32>
      %49 = vector.shape_cast %46 : vector<22x128xf32> to vector<1x22x128xf32>
      tpu.vector_store %arg7[%c8, %c0_32, %c0_33], %49 {strides = array<i32>} : memref<14x22x128xf32, #tpu.memory_space<vmem>>, vector<1x22x128xf32>,
      %c1_i32_34 = arith.constant 1 : i32
      %50 = tpu.dynamic_rotate %14 by %c1_i32_34 dim 1 : vector<22x128xf32>, i32 -> vector<22x128xf32>
      %c9 = arith.constant 9 : index
      %c0_35 = arith.constant 0 : index
      %c0_36 = arith.constant 0 : index
      %51 = vector.load %arg7[%c9, %c0_35, %c0_36] : memref<14x22x128xf32, #tpu.memory_space<vmem>>, vector<1x22x128xf32>
      %52 = vector.shape_cast %51 : vector<1x22x128xf32> to vector<22x128xf32>
      %53 = vector.shape_cast %50 : vector<22x128xf32> to vector<1x22x128xf32>
      tpu.vector_store %arg7[%c9, %c0_35, %c0_36], %53 {strides = array<i32>} : memref<14x22x128xf32, #tpu.memory_space<vmem>>, vector<1x22x128xf32>,
      %c10 = arith.constant 10 : index
      %c0_37 = arith.constant 0 : index
      %c0_38 = arith.constant 0 : index
      %54 = vector.load %arg7[%c10, %c0_37, %c0_38] : memref<14x22x128xf32, #tpu.memory_space<vmem>>, vector<1x22x128xf32>
      %55 = vector.shape_cast %54 : vector<1x22x128xf32> to vector<22x128xf32>
      %56 = vector.shape_cast %14 : vector<22x128xf32> to vector<1x22x128xf32>
      tpu.vector_store %arg7[%c10, %c0_37, %c0_38], %56 {strides = array<i32>} : memref<14x22x128xf32, #tpu.memory_space<vmem>>, vector<1x22x128xf32>,
      %c127_i32_39 = arith.constant 127 : i32
      %57 = tpu.dynamic_rotate %14 by %c127_i32_39 dim 1 : vector<22x128xf32>, i32 -> vector<22x128xf32>
      %c11 = arith.constant 11 : index
      %c0_40 = arith.constant 0 : index
      %c0_41 = arith.constant 0 : index
      %58 = vector.load %arg7[%c11, %c0_40, %c0_41] : memref<14x22x128xf32, #tpu.memory_space<vmem>>, vector<1x22x128xf32>
      %59 = vector.shape_cast %58 : vector<1x22x128xf32> to vector<22x128xf32>
      %60 = vector.shape_cast %57 : vector<22x128xf32> to vector<1x22x128xf32>
      tpu.vector_store %arg7[%c11, %c0_40, %c0_41], %60 {strides = array<i32>} : memref<14x22x128xf32, #tpu.memory_space<vmem>>, vector<1x22x128xf32>,
      %c126_i32_42 = arith.constant 126 : i32
      %61 = tpu.dynamic_rotate %14 by %c126_i32_42 dim 1 : vector<22x128xf32>, i32 -> vector<22x128xf32>
      %c12 = arith.constant 12 : index
      %c0_43 = arith.constant 0 : index
      %c0_44 = arith.constant 0 : index
      %62 = vector.load %arg7[%c12, %c0_43, %c0_44] : memref<14x22x128xf32, #tpu.memory_space<vmem>>, vector<1x22x128xf32>
      %63 = vector.shape_cast %62 : vector<1x22x128xf32> to vector<22x128xf32>
      %64 = vector.shape_cast %61 : vector<22x128xf32> to vector<1x22x128xf32>
      tpu.vector_store %arg7[%c12, %c0_43, %c0_44], %64 {strides = array<i32>} : memref<14x22x128xf32, #tpu.memory_space<vmem>>, vector<1x22x128xf32>,
      %c125_i32_45 = arith.constant 125 : i32
      %65 = tpu.dynamic_rotate %14 by %c125_i32_45 dim 1 : vector<22x128xf32>, i32 -> vector<22x128xf32>
      %c13 = arith.constant 13 : index
      %c0_46 = arith.constant 0 : index
      %c0_47 = arith.constant 0 : index
      %66 = vector.load %arg7[%c13, %c0_46, %c0_47] : memref<14x22x128xf32, #tpu.memory_space<vmem>>, vector<1x22x128xf32>
      %67 = vector.shape_cast %66 : vector<1x22x128xf32> to vector<22x128xf32>
      %68 = vector.shape_cast %65 : vector<22x128xf32> to vector<1x22x128xf32>
      tpu.vector_store %arg7[%c13, %c0_46, %c0_47], %68 {strides = array<i32>} : memref<14x22x128xf32, #tpu.memory_space<vmem>>, vector<1x22x128xf32>,
      %cst_48 = arith.constant 0.000000e+00 : f32
      %69 = vector.broadcast %cst_48 : f32 to vector<16x128xf32>
      %cst_49 = arith.constant 0.000000e+00 : f32
      %70 = vector.broadcast %cst_49 : f32 to vector<16x128xf32>
      %cst_50 = arith.constant 0.000000e+00 : f32
      %71 = vector.broadcast %cst_50 : f32 to vector<16x128xf32>
      %cst_51 = arith.constant 0.000000e+00 : f32
      %72 = vector.broadcast %cst_51 : f32 to vector<16x128xf32>
      %c0_52 = arith.constant 0 : index
      %73 = memref.load %arg2[%c0_52] : memref<98xf32, #tpu.memory_space<smem>>
      %c0_53 = arith.constant 0 : index
      %c0_54 = arith.constant 0 : index
      %c0_55 = arith.constant 0 : index
      %74 = vector.load %arg7[%c0_53, %c0_54, %c0_55] : memref<14x22x128xf32, #tpu.memory_space<vmem>>, vector<1x16x128xf32>
      %75 = vector.shape_cast %74 : vector<1x16x128xf32> to vector<16x128xf32>
      %76 = vector.broadcast %73 : f32 to vector<16x128xf32>
      %77 = arith.mulf %76, %75 : vector<16x128xf32>
      %78 = arith.addf %69, %77 : vector<16x128xf32>
      %c7_56 = arith.constant 7 : index
      %79 = memref.load %arg2[%c7_56] : memref<98xf32, #tpu.memory_space<smem>>
      %c0_57 = arith.constant 0 : index
      %c1_58 = arith.constant 1 : index
      %c0_59 = arith.constant 0 : index
      %80 = vector.load %arg7[%c0_57, %c1_58, %c0_59] : memref<14x22x128xf32, #tpu.memory_space<vmem>>, vector<1x16x128xf32>
      %81 = vector.shape_cast %80 : vector<1x16x128xf32> to vector<16x128xf32>
      %82 = vector.broadcast %79 : f32 to vector<16x128xf32>
      %83 = arith.mulf %82, %81 : vector<16x128xf32>
      %84 = arith.addf %70, %83 : vector<16x128xf32>
      %c14 = arith.constant 14 : index
      %85 = memref.load %arg2[%c14] : memref<98xf32, #tpu.memory_space<smem>>
      %c0_60 = arith.constant 0 : index
      %c2_61 = arith.constant 2 : index
      %c0_62 = arith.constant 0 : index
      %86 = vector.load %arg7[%c0_60, %c2_61, %c0_62] : memref<14x22x128xf32, #tpu.memory_space<vmem>>, vector<1x16x128xf32>
      %87 = vector.shape_cast %86 : vector<1x16x128xf32> to vector<16x128xf32>
      %88 = vector.broadcast %85 : f32 to vector<16x128xf32>
      %89 = arith.mulf %88, %87 : vector<16x128xf32>
      %90 = arith.addf %71, %89 : vector<16x128xf32>
      %c21 = arith.constant 21 : index
      %91 = memref.load %arg2[%c21] : memref<98xf32, #tpu.memory_space<smem>>
      %c0_63 = arith.constant 0 : index
      %c3_64 = arith.constant 3 : index
      %c0_65 = arith.constant 0 : index
      %92 = vector.load %arg7[%c0_63, %c3_64, %c0_65] : memref<14x22x128xf32, #tpu.memory_space<vmem>>, vector<1x16x128xf32>
      %93 = vector.shape_cast %92 : vector<1x16x128xf32> to vector<16x128xf32>
      %94 = vector.broadcast %91 : f32 to vector<16x128xf32>
      %95 = arith.mulf %94, %93 : vector<16x128xf32>
      %96 = arith.addf %72, %95 : vector<16x128xf32>
      %c28 = arith.constant 28 : index
      %97 = memref.load %arg2[%c28] : memref<98xf32, #tpu.memory_space<smem>>
      %c0_66 = arith.constant 0 : index
      %c4_67 = arith.constant 4 : index
      %c0_68 = arith.constant 0 : index
      %98 = vector.load %arg7[%c0_66, %c4_67, %c0_68] : memref<14x22x128xf32, #tpu.memory_space<vmem>>, vector<1x16x128xf32>
      %99 = vector.shape_cast %98 : vector<1x16x128xf32> to vector<16x128xf32>
      %100 = vector.broadcast %97 : f32 to vector<16x128xf32>
      %101 = arith.mulf %100, %99 : vector<16x128xf32>
      %102 = arith.addf %78, %101 : vector<16x128xf32>
      %c35 = arith.constant 35 : index
      %103 = memref.load %arg2[%c35] : memref<98xf32, #tpu.memory_space<smem>>
      %c0_69 = arith.constant 0 : index
      %c5_70 = arith.constant 5 : index
      %c0_71 = arith.constant 0 : index
      %104 = vector.load %arg7[%c0_69, %c5_70, %c0_71] : memref<14x22x128xf32, #tpu.memory_space<vmem>>, vector<1x16x128xf32>
      %105 = vector.shape_cast %104 : vector<1x16x128xf32> to vector<16x128xf32>
      %106 = vector.broadcast %103 : f32 to vector<16x128xf32>
      %107 = arith.mulf %106, %105 : vector<16x128xf32>
      %108 = arith.addf %84, %107 : vector<16x128xf32>
      %c42 = arith.constant 42 : index
      %109 = memref.load %arg2[%c42] : memref<98xf32, #tpu.memory_space<smem>>
      %c0_72 = arith.constant 0 : index
      %c6_73 = arith.constant 6 : index
      %c0_74 = arith.constant 0 : index
      %110 = vector.load %arg7[%c0_72, %c6_73, %c0_74] : memref<14x22x128xf32, #tpu.memory_space<vmem>>, vector<1x16x128xf32>
      %111 = vector.shape_cast %110 : vector<1x16x128xf32> to vector<16x128xf32>
      %112 = vector.broadcast %109 : f32 to vector<16x128xf32>
      %113 = arith.mulf %112, %111 : vector<16x128xf32>
      %114 = arith.addf %90, %113 : vector<16x128xf32>
      %c1_75 = arith.constant 1 : index
      %115 = memref.load %arg2[%c1_75] : memref<98xf32, #tpu.memory_space<smem>>
      %c1_76 = arith.constant 1 : index
      %c0_77 = arith.constant 0 : index
      %c0_78 = arith.constant 0 : index
      %116 = vector.load %arg7[%c1_76, %c0_77, %c0_78] : memref<14x22x128xf32, #tpu.memory_space<vmem>>, vector<1x16x128xf32>
      %117 = vector.shape_cast %116 : vector<1x16x128xf32> to vector<16x128xf32>
      %118 = vector.broadcast %115 : f32 to vector<16x128xf32>
      %119 = arith.mulf %118, %117 : vector<16x128xf32>
      %120 = arith.addf %96, %119 : vector<16x128xf32>
      %c8_79 = arith.constant 8 : index
      %121 = memref.load %arg2[%c8_79] : memref<98xf32, #tpu.memory_space<smem>>
      %c1_80 = arith.constant 1 : index
      %c1_81 = arith.constant 1 : index
      %c0_82 = arith.constant 0 : index
      %122 = vector.load %arg7[%c1_80, %c1_81, %c0_82] : memref<14x22x128xf32, #tpu.memory_space<vmem>>, vector<1x16x128xf32>
      %123 = vector.shape_cast %122 : vector<1x16x128xf32> to vector<16x128xf32>
      %124 = vector.broadcast %121 : f32 to vector<16x128xf32>
      %125 = arith.mulf %124, %123 : vector<16x128xf32>
      %126 = arith.addf %102, %125 : vector<16x128xf32>
      %c15 = arith.constant 15 : index
      %127 = memref.load %arg2[%c15] : memref<98xf32, #tpu.memory_space<smem>>
      %c1_83 = arith.constant 1 : index
      %c2_84 = arith.constant 2 : index
      %c0_85 = arith.constant 0 : index
      %128 = vector.load %arg7[%c1_83, %c2_84, %c0_85] : memref<14x22x128xf32, #tpu.memory_space<vmem>>, vector<1x16x128xf32>
      %129 = vector.shape_cast %128 : vector<1x16x128xf32> to vector<16x128xf32>
      %130 = vector.broadcast %127 : f32 to vector<16x128xf32>
      %131 = arith.mulf %130, %129 : vector<16x128xf32>
      %132 = arith.addf %108, %131 : vector<16x128xf32>
      %c22 = arith.constant 22 : index
      %133 = memref.load %arg2[%c22] : memref<98xf32, #tpu.memory_space<smem>>
      %c1_86 = arith.constant 1 : index
      %c3_87 = arith.constant 3 : index
      %c0_88 = arith.constant 0 : index
      %134 = vector.load %arg7[%c1_86, %c3_87, %c0_88] : memref<14x22x128xf32, #tpu.memory_space<vmem>>, vector<1x16x128xf32>
      %135 = vector.shape_cast %134 : vector<1x16x128xf32> to vector<16x128xf32>
      %136 = vector.broadcast %133 : f32 to vector<16x128xf32>
      %137 = arith.mulf %136, %135 : vector<16x128xf32>
      %138 = arith.addf %114, %137 : vector<16x128xf32>
      %c29 = arith.constant 29 : index
      %139 = memref.load %arg2[%c29] : memref<98xf32, #tpu.memory_space<smem>>
      %c1_89 = arith.constant 1 : index
      %c4_90 = arith.constant 4 : index
      %c0_91 = arith.constant 0 : index
      %140 = vector.load %arg7[%c1_89, %c4_90, %c0_91] : memref<14x22x128xf32, #tpu.memory_space<vmem>>, vector<1x16x128xf32>
      %141 = vector.shape_cast %140 : vector<1x16x128xf32> to vector<16x128xf32>
      %142 = vector.broadcast %139 : f32 to vector<16x128xf32>
      %143 = arith.mulf %142, %141 : vector<16x128xf32>
      %144 = arith.addf %120, %143 : vector<16x128xf32>
      %c36 = arith.constant 36 : index
      %145 = memref.load %arg2[%c36] : memref<98xf32, #tpu.memory_space<smem>>
      %c1_92 = arith.constant 1 : index
      %c5_93 = arith.constant 5 : index
      %c0_94 = arith.constant 0 : index
      %146 = vector.load %arg7[%c1_92, %c5_93, %c0_94] : memref<14x22x128xf32, #tpu.memory_space<vmem>>, vector<1x16x128xf32>
      %147 = vector.shape_cast %146 : vector<1x16x128xf32> to vector<16x128xf32>
      %148 = vector.broadcast %145 : f32 to vector<16x128xf32>
      %149 = arith.mulf %148, %147 : vector<16x128xf32>
      %150 = arith.addf %126, %149 : vector<16x128xf32>
      %c43 = arith.constant 43 : index
      %151 = memref.load %arg2[%c43] : memref<98xf32, #tpu.memory_space<smem>>
      %c1_95 = arith.constant 1 : index
      %c6_96 = arith.constant 6 : index
      %c0_97 = arith.constant 0 : index
      %152 = vector.load %arg7[%c1_95, %c6_96, %c0_97] : memref<14x22x128xf32, #tpu.memory_space<vmem>>, vector<1x16x128xf32>
      %153 = vector.shape_cast %152 : vector<1x16x128xf32> to vector<16x128xf32>
      %154 = vector.broadcast %151 : f32 to vector<16x128xf32>
      %155 = arith.mulf %154, %153 : vector<16x128xf32>
      %156 = arith.addf %132, %155 : vector<16x128xf32>
      %c2_98 = arith.constant 2 : index
      %157 = memref.load %arg2[%c2_98] : memref<98xf32, #tpu.memory_space<smem>>
      %c2_99 = arith.constant 2 : index
      %c0_100 = arith.constant 0 : index
      %c0_101 = arith.constant 0 : index
      %158 = vector.load %arg7[%c2_99, %c0_100, %c0_101] : memref<14x22x128xf32, #tpu.memory_space<vmem>>, vector<1x16x128xf32>
      %159 = vector.shape_cast %158 : vector<1x16x128xf32> to vector<16x128xf32>
      %160 = vector.broadcast %157 : f32 to vector<16x128xf32>
      %161 = arith.mulf %160, %159 : vector<16x128xf32>
      %162 = arith.addf %138, %161 : vector<16x128xf32>
      %c9_102 = arith.constant 9 : index
      %163 = memref.load %arg2[%c9_102] : memref<98xf32, #tpu.memory_space<smem>>
      %c2_103 = arith.constant 2 : index
      %c1_104 = arith.constant 1 : index
      %c0_105 = arith.constant 0 : index
      %164 = vector.load %arg7[%c2_103, %c1_104, %c0_105] : memref<14x22x128xf32, #tpu.memory_space<vmem>>, vector<1x16x128xf32>
      %165 = vector.shape_cast %164 : vector<1x16x128xf32> to vector<16x128xf32>
      %166 = vector.broadcast %163 : f32 to vector<16x128xf32>
      %167 = arith.mulf %166, %165 : vector<16x128xf32>
      %168 = arith.addf %144, %167 : vector<16x128xf32>
      %c16 = arith.constant 16 : index
      %169 = memref.load %arg2[%c16] : memref<98xf32, #tpu.memory_space<smem>>
      %c2_106 = arith.constant 2 : index
      %c2_107 = arith.constant 2 : index
      %c0_108 = arith.constant 0 : index
      %170 = vector.load %arg7[%c2_106, %c2_107, %c0_108] : memref<14x22x128xf32, #tpu.memory_space<vmem>>, vector<1x16x128xf32>
      %171 = vector.shape_cast %170 : vector<1x16x128xf32> to vector<16x128xf32>
      %172 = vector.broadcast %169 : f32 to vector<16x128xf32>
      %173 = arith.mulf %172, %171 : vector<16x128xf32>
      %174 = arith.addf %150, %173 : vector<16x128xf32>
      %c23 = arith.constant 23 : index
      %175 = memref.load %arg2[%c23] : memref<98xf32, #tpu.memory_space<smem>>
      %c2_109 = arith.constant 2 : index
      %c3_110 = arith.constant 3 : index
      %c0_111 = arith.constant 0 : index
      %176 = vector.load %arg7[%c2_109, %c3_110, %c0_111] : memref<14x22x128xf32, #tpu.memory_space<vmem>>, vector<1x16x128xf32>
      %177 = vector.shape_cast %176 : vector<1x16x128xf32> to vector<16x128xf32>
      %178 = vector.broadcast %175 : f32 to vector<16x128xf32>
      %179 = arith.mulf %178, %177 : vector<16x128xf32>
      %180 = arith.addf %156, %179 : vector<16x128xf32>
      %c30 = arith.constant 30 : index
      %181 = memref.load %arg2[%c30] : memref<98xf32, #tpu.memory_space<smem>>
      %c2_112 = arith.constant 2 : index
      %c4_113 = arith.constant 4 : index
      %c0_114 = arith.constant 0 : index
      %182 = vector.load %arg7[%c2_112, %c4_113, %c0_114] : memref<14x22x128xf32, #tpu.memory_space<vmem>>, vector<1x16x128xf32>
      %183 = vector.shape_cast %182 : vector<1x16x128xf32> to vector<16x128xf32>
      %184 = vector.broadcast %181 : f32 to vector<16x128xf32>
      %185 = arith.mulf %184, %183 : vector<16x128xf32>
      %186 = arith.addf %162, %185 : vector<16x128xf32>
      %c37 = arith.constant 37 : index
      %187 = memref.load %arg2[%c37] : memref<98xf32, #tpu.memory_space<smem>>
      %c2_115 = arith.constant 2 : index
      %c5_116 = arith.constant 5 : index
      %c0_117 = arith.constant 0 : index
      %188 = vector.load %arg7[%c2_115, %c5_116, %c0_117] : memref<14x22x128xf32, #tpu.memory_space<vmem>>, vector<1x16x128xf32>
      %189 = vector.shape_cast %188 : vector<1x16x128xf32> to vector<16x128xf32>
      %190 = vector.broadcast %187 : f32 to vector<16x128xf32>
      %191 = arith.mulf %190, %189 : vector<16x128xf32>
      %192 = arith.addf %168, %191 : vector<16x128xf32>
      %c44 = arith.constant 44 : index
      %193 = memref.load %arg2[%c44] : memref<98xf32, #tpu.memory_space<smem>>
      %c2_118 = arith.constant 2 : index
      %c6_119 = arith.constant 6 : index
      %c0_120 = arith.constant 0 : index
      %194 = vector.load %arg7[%c2_118, %c6_119, %c0_120] : memref<14x22x128xf32, #tpu.memory_space<vmem>>, vector<1x16x128xf32>
      %195 = vector.shape_cast %194 : vector<1x16x128xf32> to vector<16x128xf32>
      %196 = vector.broadcast %193 : f32 to vector<16x128xf32>
      %197 = arith.mulf %196, %195 : vector<16x128xf32>
      %198 = arith.addf %174, %197 : vector<16x128xf32>
      %c3_121 = arith.constant 3 : index
      %199 = memref.load %arg2[%c3_121] : memref<98xf32, #tpu.memory_space<smem>>
      %c3_122 = arith.constant 3 : index
      %c0_123 = arith.constant 0 : index
      %c0_124 = arith.constant 0 : index
      %200 = vector.load %arg7[%c3_122, %c0_123, %c0_124] : memref<14x22x128xf32, #tpu.memory_space<vmem>>, vector<1x16x128xf32>
      %201 = vector.shape_cast %200 : vector<1x16x128xf32> to vector<16x128xf32>
      %202 = vector.broadcast %199 : f32 to vector<16x128xf32>
      %203 = arith.mulf %202, %201 : vector<16x128xf32>
      %204 = arith.addf %180, %203 : vector<16x128xf32>
      %c10_125 = arith.constant 10 : index
      %205 = memref.load %arg2[%c10_125] : memref<98xf32, #tpu.memory_space<smem>>
      %c3_126 = arith.constant 3 : index
      %c1_127 = arith.constant 1 : index
      %c0_128 = arith.constant 0 : index
      %206 = vector.load %arg7[%c3_126, %c1_127, %c0_128] : memref<14x22x128xf32, #tpu.memory_space<vmem>>, vector<1x16x128xf32>
      %207 = vector.shape_cast %206 : vector<1x16x128xf32> to vector<16x128xf32>
      %208 = vector.broadcast %205 : f32 to vector<16x128xf32>
      %209 = arith.mulf %208, %207 : vector<16x128xf32>
      %210 = arith.addf %186, %209 : vector<16x128xf32>
      %c17 = arith.constant 17 : index
      %211 = memref.load %arg2[%c17] : memref<98xf32, #tpu.memory_space<smem>>
      %c3_129 = arith.constant 3 : index
      %c2_130 = arith.constant 2 : index
      %c0_131 = arith.constant 0 : index
      %212 = vector.load %arg7[%c3_129, %c2_130, %c0_131] : memref<14x22x128xf32, #tpu.memory_space<vmem>>, vector<1x16x128xf32>
      %213 = vector.shape_cast %212 : vector<1x16x128xf32> to vector<16x128xf32>
      %214 = vector.broadcast %211 : f32 to vector<16x128xf32>
      %215 = arith.mulf %214, %213 : vector<16x128xf32>
      %216 = arith.addf %192, %215 : vector<16x128xf32>
      %c24 = arith.constant 24 : index
      %217 = memref.load %arg2[%c24] : memref<98xf32, #tpu.memory_space<smem>>
      %c3_132 = arith.constant 3 : index
      %c3_133 = arith.constant 3 : index
      %c0_134 = arith.constant 0 : index
      %218 = vector.load %arg7[%c3_132, %c3_133, %c0_134] : memref<14x22x128xf32, #tpu.memory_space<vmem>>, vector<1x16x128xf32>
      %219 = vector.shape_cast %218 : vector<1x16x128xf32> to vector<16x128xf32>
      %220 = vector.broadcast %217 : f32 to vector<16x128xf32>
      %221 = arith.mulf %220, %219 : vector<16x128xf32>
      %222 = arith.addf %198, %221 : vector<16x128xf32>
      %c31 = arith.constant 31 : index
      %223 = memref.load %arg2[%c31] : memref<98xf32, #tpu.memory_space<smem>>
      %c3_135 = arith.constant 3 : index
      %c4_136 = arith.constant 4 : index
      %c0_137 = arith.constant 0 : index
      %224 = vector.load %arg7[%c3_135, %c4_136, %c0_137] : memref<14x22x128xf32, #tpu.memory_space<vmem>>, vector<1x16x128xf32>
      %225 = vector.shape_cast %224 : vector<1x16x128xf32> to vector<16x128xf32>
      %226 = vector.broadcast %223 : f32 to vector<16x128xf32>
      %227 = arith.mulf %226, %225 : vector<16x128xf32>
      %228 = arith.addf %204, %227 : vector<16x128xf32>
      %c38 = arith.constant 38 : index
      %229 = memref.load %arg2[%c38] : memref<98xf32, #tpu.memory_space<smem>>
      %c3_138 = arith.constant 3 : index
      %c5_139 = arith.constant 5 : index
      %c0_140 = arith.constant 0 : index
      %230 = vector.load %arg7[%c3_138, %c5_139, %c0_140] : memref<14x22x128xf32, #tpu.memory_space<vmem>>, vector<1x16x128xf32>
      %231 = vector.shape_cast %230 : vector<1x16x128xf32> to vector<16x128xf32>
      %232 = vector.broadcast %229 : f32 to vector<16x128xf32>
      %233 = arith.mulf %232, %231 : vector<16x128xf32>
      %234 = arith.addf %210, %233 : vector<16x128xf32>
      %c45 = arith.constant 45 : index
      %235 = memref.load %arg2[%c45] : memref<98xf32, #tpu.memory_space<smem>>
      %c3_141 = arith.constant 3 : index
      %c6_142 = arith.constant 6 : index
      %c0_143 = arith.constant 0 : index
      %236 = vector.load %arg7[%c3_141, %c6_142, %c0_143] : memref<14x22x128xf32, #tpu.memory_space<vmem>>, vector<1x16x128xf32>
      %237 = vector.shape_cast %236 : vector<1x16x128xf32> to vector<16x128xf32>
      %238 = vector.broadcast %235 : f32 to vector<16x128xf32>
      %239 = arith.mulf %238, %237 : vector<16x128xf32>
      %240 = arith.addf %216, %239 : vector<16x128xf32>
      %c4_144 = arith.constant 4 : index
      %241 = memref.load %arg2[%c4_144] : memref<98xf32, #tpu.memory_space<smem>>
      %c4_145 = arith.constant 4 : index
      %c0_146 = arith.constant 0 : index
      %c0_147 = arith.constant 0 : index
      %242 = vector.load %arg7[%c4_145, %c0_146, %c0_147] : memref<14x22x128xf32, #tpu.memory_space<vmem>>, vector<1x16x128xf32>
      %243 = vector.shape_cast %242 : vector<1x16x128xf32> to vector<16x128xf32>
      %244 = vector.broadcast %241 : f32 to vector<16x128xf32>
      %245 = arith.mulf %244, %243 : vector<16x128xf32>
      %246 = arith.addf %222, %245 : vector<16x128xf32>
      %c11_148 = arith.constant 11 : index
      %247 = memref.load %arg2[%c11_148] : memref<98xf32, #tpu.memory_space<smem>>
      %c4_149 = arith.constant 4 : index
      %c1_150 = arith.constant 1 : index
      %c0_151 = arith.constant 0 : index
      %248 = vector.load %arg7[%c4_149, %c1_150, %c0_151] : memref<14x22x128xf32, #tpu.memory_space<vmem>>, vector<1x16x128xf32>
      %249 = vector.shape_cast %248 : vector<1x16x128xf32> to vector<16x128xf32>
      %250 = vector.broadcast %247 : f32 to vector<16x128xf32>
      %251 = arith.mulf %250, %249 : vector<16x128xf32>
      %252 = arith.addf %228, %251 : vector<16x128xf32>
      %c18 = arith.constant 18 : index
      %253 = memref.load %arg2[%c18] : memref<98xf32, #tpu.memory_space<smem>>
      %c4_152 = arith.constant 4 : index
      %c2_153 = arith.constant 2 : index
      %c0_154 = arith.constant 0 : index
      %254 = vector.load %arg7[%c4_152, %c2_153, %c0_154] : memref<14x22x128xf32, #tpu.memory_space<vmem>>, vector<1x16x128xf32>
      %255 = vector.shape_cast %254 : vector<1x16x128xf32> to vector<16x128xf32>
      %256 = vector.broadcast %253 : f32 to vector<16x128xf32>
      %257 = arith.mulf %256, %255 : vector<16x128xf32>
      %258 = arith.addf %234, %257 : vector<16x128xf32>
      %c25 = arith.constant 25 : index
      %259 = memref.load %arg2[%c25] : memref<98xf32, #tpu.memory_space<smem>>
      %c4_155 = arith.constant 4 : index
      %c3_156 = arith.constant 3 : index
      %c0_157 = arith.constant 0 : index
      %260 = vector.load %arg7[%c4_155, %c3_156, %c0_157] : memref<14x22x128xf32, #tpu.memory_space<vmem>>, vector<1x16x128xf32>
      %261 = vector.shape_cast %260 : vector<1x16x128xf32> to vector<16x128xf32>
      %262 = vector.broadcast %259 : f32 to vector<16x128xf32>
      %263 = arith.mulf %262, %261 : vector<16x128xf32>
      %264 = arith.addf %240, %263 : vector<16x128xf32>
      %c32 = arith.constant 32 : index
      %265 = memref.load %arg2[%c32] : memref<98xf32, #tpu.memory_space<smem>>
      %c4_158 = arith.constant 4 : index
      %c4_159 = arith.constant 4 : index
      %c0_160 = arith.constant 0 : index
      %266 = vector.load %arg7[%c4_158, %c4_159, %c0_160] : memref<14x22x128xf32, #tpu.memory_space<vmem>>, vector<1x16x128xf32>
      %267 = vector.shape_cast %266 : vector<1x16x128xf32> to vector<16x128xf32>
      %268 = vector.broadcast %265 : f32 to vector<16x128xf32>
      %269 = arith.mulf %268, %267 : vector<16x128xf32>
      %270 = arith.addf %246, %269 : vector<16x128xf32>
      %c39 = arith.constant 39 : index
      %271 = memref.load %arg2[%c39] : memref<98xf32, #tpu.memory_space<smem>>
      %c4_161 = arith.constant 4 : index
      %c5_162 = arith.constant 5 : index
      %c0_163 = arith.constant 0 : index
      %272 = vector.load %arg7[%c4_161, %c5_162, %c0_163] : memref<14x22x128xf32, #tpu.memory_space<vmem>>, vector<1x16x128xf32>
      %273 = vector.shape_cast %272 : vector<1x16x128xf32> to vector<16x128xf32>
      %274 = vector.broadcast %271 : f32 to vector<16x128xf32>
      %275 = arith.mulf %274, %273 : vector<16x128xf32>
      %276 = arith.addf %252, %275 : vector<16x128xf32>
      %c46 = arith.constant 46 : index
      %277 = memref.load %arg2[%c46] : memref<98xf32, #tpu.memory_space<smem>>
      %c4_164 = arith.constant 4 : index
      %c6_165 = arith.constant 6 : index
      %c0_166 = arith.constant 0 : index
      %278 = vector.load %arg7[%c4_164, %c6_165, %c0_166] : memref<14x22x128xf32, #tpu.memory_space<vmem>>, vector<1x16x128xf32>
      %279 = vector.shape_cast %278 : vector<1x16x128xf32> to vector<16x128xf32>
      %280 = vector.broadcast %277 : f32 to vector<16x128xf32>
      %281 = arith.mulf %280, %279 : vector<16x128xf32>
      %282 = arith.addf %258, %281 : vector<16x128xf32>
      %c5_167 = arith.constant 5 : index
      %283 = memref.load %arg2[%c5_167] : memref<98xf32, #tpu.memory_space<smem>>
      %c5_168 = arith.constant 5 : index
      %c0_169 = arith.constant 0 : index
      %c0_170 = arith.constant 0 : index
      %284 = vector.load %arg7[%c5_168, %c0_169, %c0_170] : memref<14x22x128xf32, #tpu.memory_space<vmem>>, vector<1x16x128xf32>
      %285 = vector.shape_cast %284 : vector<1x16x128xf32> to vector<16x128xf32>
      %286 = vector.broadcast %283 : f32 to vector<16x128xf32>
      %287 = arith.mulf %286, %285 : vector<16x128xf32>
      %288 = arith.addf %264, %287 : vector<16x128xf32>
      %c12_171 = arith.constant 12 : index
      %289 = memref.load %arg2[%c12_171] : memref<98xf32, #tpu.memory_space<smem>>
      %c5_172 = arith.constant 5 : index
      %c1_173 = arith.constant 1 : index
      %c0_174 = arith.constant 0 : index
      %290 = vector.load %arg7[%c5_172, %c1_173, %c0_174] : memref<14x22x128xf32, #tpu.memory_space<vmem>>, vector<1x16x128xf32>
      %291 = vector.shape_cast %290 : vector<1x16x128xf32> to vector<16x128xf32>
      %292 = vector.broadcast %289 : f32 to vector<16x128xf32>
      %293 = arith.mulf %292, %291 : vector<16x128xf32>
      %294 = arith.addf %270, %293 : vector<16x128xf32>
      %c19 = arith.constant 19 : index
      %295 = memref.load %arg2[%c19] : memref<98xf32, #tpu.memory_space<smem>>
      %c5_175 = arith.constant 5 : index
      %c2_176 = arith.constant 2 : index
      %c0_177 = arith.constant 0 : index
      %296 = vector.load %arg7[%c5_175, %c2_176, %c0_177] : memref<14x22x128xf32, #tpu.memory_space<vmem>>, vector<1x16x128xf32>
      %297 = vector.shape_cast %296 : vector<1x16x128xf32> to vector<16x128xf32>
      %298 = vector.broadcast %295 : f32 to vector<16x128xf32>
      %299 = arith.mulf %298, %297 : vector<16x128xf32>
      %300 = arith.addf %276, %299 : vector<16x128xf32>
      %c26 = arith.constant 26 : index
      %301 = memref.load %arg2[%c26] : memref<98xf32, #tpu.memory_space<smem>>
      %c5_178 = arith.constant 5 : index
      %c3_179 = arith.constant 3 : index
      %c0_180 = arith.constant 0 : index
      %302 = vector.load %arg7[%c5_178, %c3_179, %c0_180] : memref<14x22x128xf32, #tpu.memory_space<vmem>>, vector<1x16x128xf32>
      %303 = vector.shape_cast %302 : vector<1x16x128xf32> to vector<16x128xf32>
      %304 = vector.broadcast %301 : f32 to vector<16x128xf32>
      %305 = arith.mulf %304, %303 : vector<16x128xf32>
      %306 = arith.addf %282, %305 : vector<16x128xf32>
      %c33 = arith.constant 33 : index
      %307 = memref.load %arg2[%c33] : memref<98xf32, #tpu.memory_space<smem>>
      %c5_181 = arith.constant 5 : index
      %c4_182 = arith.constant 4 : index
      %c0_183 = arith.constant 0 : index
      %308 = vector.load %arg7[%c5_181, %c4_182, %c0_183] : memref<14x22x128xf32, #tpu.memory_space<vmem>>, vector<1x16x128xf32>
      %309 = vector.shape_cast %308 : vector<1x16x128xf32> to vector<16x128xf32>
      %310 = vector.broadcast %307 : f32 to vector<16x128xf32>
      %311 = arith.mulf %310, %309 : vector<16x128xf32>
      %312 = arith.addf %288, %311 : vector<16x128xf32>
      %c40 = arith.constant 40 : index
      %313 = memref.load %arg2[%c40] : memref<98xf32, #tpu.memory_space<smem>>
      %c5_184 = arith.constant 5 : index
      %c5_185 = arith.constant 5 : index
      %c0_186 = arith.constant 0 : index
      %314 = vector.load %arg7[%c5_184, %c5_185, %c0_186] : memref<14x22x128xf32, #tpu.memory_space<vmem>>, vector<1x16x128xf32>
      %315 = vector.shape_cast %314 : vector<1x16x128xf32> to vector<16x128xf32>
      %316 = vector.broadcast %313 : f32 to vector<16x128xf32>
      %317 = arith.mulf %316, %315 : vector<16x128xf32>
      %318 = arith.addf %294, %317 : vector<16x128xf32>
      %c47 = arith.constant 47 : index
      %319 = memref.load %arg2[%c47] : memref<98xf32, #tpu.memory_space<smem>>
      %c5_187 = arith.constant 5 : index
      %c6_188 = arith.constant 6 : index
      %c0_189 = arith.constant 0 : index
      %320 = vector.load %arg7[%c5_187, %c6_188, %c0_189] : memref<14x22x128xf32, #tpu.memory_space<vmem>>, vector<1x16x128xf32>
      %321 = vector.shape_cast %320 : vector<1x16x128xf32> to vector<16x128xf32>
      %322 = vector.broadcast %319 : f32 to vector<16x128xf32>
      %323 = arith.mulf %322, %321 : vector<16x128xf32>
      %324 = arith.addf %300, %323 : vector<16x128xf32>
      %c6_190 = arith.constant 6 : index
      %325 = memref.load %arg2[%c6_190] : memref<98xf32, #tpu.memory_space<smem>>
      %c6_191 = arith.constant 6 : index
      %c0_192 = arith.constant 0 : index
      %c0_193 = arith.constant 0 : index
      %326 = vector.load %arg7[%c6_191, %c0_192, %c0_193] : memref<14x22x128xf32, #tpu.memory_space<vmem>>, vector<1x16x128xf32>
      %327 = vector.shape_cast %326 : vector<1x16x128xf32> to vector<16x128xf32>
      %328 = vector.broadcast %325 : f32 to vector<16x128xf32>
      %329 = arith.mulf %328, %327 : vector<16x128xf32>
      %330 = arith.addf %306, %329 : vector<16x128xf32>
      %c13_194 = arith.constant 13 : index
      %331 = memref.load %arg2[%c13_194] : memref<98xf32, #tpu.memory_space<smem>>
      %c6_195 = arith.constant 6 : index
      %c1_196 = arith.constant 1 : index
      %c0_197 = arith.constant 0 : index
      %332 = vector.load %arg7[%c6_195, %c1_196, %c0_197] : memref<14x22x128xf32, #tpu.memory_space<vmem>>, vector<1x16x128xf32>
      %333 = vector.shape_cast %332 : vector<1x16x128xf32> to vector<16x128xf32>
      %334 = vector.broadcast %331 : f32 to vector<16x128xf32>
      %335 = arith.mulf %334, %333 : vector<16x128xf32>
      %336 = arith.addf %312, %335 : vector<16x128xf32>
      %c20 = arith.constant 20 : index
      %337 = memref.load %arg2[%c20] : memref<98xf32, #tpu.memory_space<smem>>
      %c6_198 = arith.constant 6 : index
      %c2_199 = arith.constant 2 : index
      %c0_200 = arith.constant 0 : index
      %338 = vector.load %arg7[%c6_198, %c2_199, %c0_200] : memref<14x22x128xf32, #tpu.memory_space<vmem>>, vector<1x16x128xf32>
      %339 = vector.shape_cast %338 : vector<1x16x128xf32> to vector<16x128xf32>
      %340 = vector.broadcast %337 : f32 to vector<16x128xf32>
      %341 = arith.mulf %340, %339 : vector<16x128xf32>
      %342 = arith.addf %318, %341 : vector<16x128xf32>
      %c27 = arith.constant 27 : index
      %343 = memref.load %arg2[%c27] : memref<98xf32, #tpu.memory_space<smem>>
      %c6_201 = arith.constant 6 : index
      %c3_202 = arith.constant 3 : index
      %c0_203 = arith.constant 0 : index
      %344 = vector.load %arg7[%c6_201, %c3_202, %c0_203] : memref<14x22x128xf32, #tpu.memory_space<vmem>>, vector<1x16x128xf32>
      %345 = vector.shape_cast %344 : vector<1x16x128xf32> to vector<16x128xf32>
      %346 = vector.broadcast %343 : f32 to vector<16x128xf32>
      %347 = arith.mulf %346, %345 : vector<16x128xf32>
      %348 = arith.addf %324, %347 : vector<16x128xf32>
      %c34 = arith.constant 34 : index
      %349 = memref.load %arg2[%c34] : memref<98xf32, #tpu.memory_space<smem>>
      %c6_204 = arith.constant 6 : index
      %c4_205 = arith.constant 4 : index
      %c0_206 = arith.constant 0 : index
      %350 = vector.load %arg7[%c6_204, %c4_205, %c0_206] : memref<14x22x128xf32, #tpu.memory_space<vmem>>, vector<1x16x128xf32>
      %351 = vector.shape_cast %350 : vector<1x16x128xf32> to vector<16x128xf32>
      %352 = vector.broadcast %349 : f32 to vector<16x128xf32>
      %353 = arith.mulf %352, %351 : vector<16x128xf32>
      %354 = arith.addf %330, %353 : vector<16x128xf32>
      %c41 = arith.constant 41 : index
      %355 = memref.load %arg2[%c41] : memref<98xf32, #tpu.memory_space<smem>>
      %c6_207 = arith.constant 6 : index
      %c5_208 = arith.constant 5 : index
      %c0_209 = arith.constant 0 : index
      %356 = vector.load %arg7[%c6_207, %c5_208, %c0_209] : memref<14x22x128xf32, #tpu.memory_space<vmem>>, vector<1x16x128xf32>
      %357 = vector.shape_cast %356 : vector<1x16x128xf32> to vector<16x128xf32>
      %358 = vector.broadcast %355 : f32 to vector<16x128xf32>
      %359 = arith.mulf %358, %357 : vector<16x128xf32>
      %360 = arith.addf %336, %359 : vector<16x128xf32>
      %c48 = arith.constant 48 : index
      %361 = memref.load %arg2[%c48] : memref<98xf32, #tpu.memory_space<smem>>
      %c6_210 = arith.constant 6 : index
      %c6_211 = arith.constant 6 : index
      %c0_212 = arith.constant 0 : index
      %362 = vector.load %arg7[%c6_210, %c6_211, %c0_212] : memref<14x22x128xf32, #tpu.memory_space<vmem>>, vector<1x16x128xf32>
      %363 = vector.shape_cast %362 : vector<1x16x128xf32> to vector<16x128xf32>
      %364 = vector.broadcast %361 : f32 to vector<16x128xf32>
      %365 = arith.mulf %364, %363 : vector<16x128xf32>
      %366 = arith.addf %342, %365 : vector<16x128xf32>
      %c49 = arith.constant 49 : index
      %367 = memref.load %arg2[%c49] : memref<98xf32, #tpu.memory_space<smem>>
      %c7_213 = arith.constant 7 : index
      %c0_214 = arith.constant 0 : index
      %c0_215 = arith.constant 0 : index
      %368 = vector.load %arg7[%c7_213, %c0_214, %c0_215] : memref<14x22x128xf32, #tpu.memory_space<vmem>>, vector<1x16x128xf32>
      %369 = vector.shape_cast %368 : vector<1x16x128xf32> to vector<16x128xf32>
      %370 = vector.broadcast %367 : f32 to vector<16x128xf32>
      %371 = arith.mulf %370, %369 : vector<16x128xf32>
      %372 = arith.addf %348, %371 : vector<16x128xf32>
      %c56 = arith.constant 56 : index
      %373 = memref.load %arg2[%c56] : memref<98xf32, #tpu.memory_space<smem>>
      %c7_216 = arith.constant 7 : index
      %c1_217 = arith.constant 1 : index
      %c0_218 = arith.constant 0 : index
      %374 = vector.load %arg7[%c7_216, %c1_217, %c0_218] : memref<14x22x128xf32, #tpu.memory_space<vmem>>, vector<1x16x128xf32>
      %375 = vector.shape_cast %374 : vector<1x16x128xf32> to vector<16x128xf32>
      %376 = vector.broadcast %373 : f32 to vector<16x128xf32>
      %377 = arith.mulf %376, %375 : vector<16x128xf32>
      %378 = arith.addf %354, %377 : vector<16x128xf32>
      %c63 = arith.constant 63 : index
      %379 = memref.load %arg2[%c63] : memref<98xf32, #tpu.memory_space<smem>>
      %c7_219 = arith.constant 7 : index
      %c2_220 = arith.constant 2 : index
      %c0_221 = arith.constant 0 : index
      %380 = vector.load %arg7[%c7_219, %c2_220, %c0_221] : memref<14x22x128xf32, #tpu.memory_space<vmem>>, vector<1x16x128xf32>
      %381 = vector.shape_cast %380 : vector<1x16x128xf32> to vector<16x128xf32>
      %382 = vector.broadcast %379 : f32 to vector<16x128xf32>
      %383 = arith.mulf %382, %381 : vector<16x128xf32>
      %384 = arith.addf %360, %383 : vector<16x128xf32>
      %c70 = arith.constant 70 : index
      %385 = memref.load %arg2[%c70] : memref<98xf32, #tpu.memory_space<smem>>
      %c7_222 = arith.constant 7 : index
      %c3_223 = arith.constant 3 : index
      %c0_224 = arith.constant 0 : index
      %386 = vector.load %arg7[%c7_222, %c3_223, %c0_224] : memref<14x22x128xf32, #tpu.memory_space<vmem>>, vector<1x16x128xf32>
      %387 = vector.shape_cast %386 : vector<1x16x128xf32> to vector<16x128xf32>
      %388 = vector.broadcast %385 : f32 to vector<16x128xf32>
      %389 = arith.mulf %388, %387 : vector<16x128xf32>
      %390 = arith.addf %366, %389 : vector<16x128xf32>
      %c77 = arith.constant 77 : index
      %391 = memref.load %arg2[%c77] : memref<98xf32, #tpu.memory_space<smem>>
      %c7_225 = arith.constant 7 : index
      %c4_226 = arith.constant 4 : index
      %c0_227 = arith.constant 0 : index
      %392 = vector.load %arg7[%c7_225, %c4_226, %c0_227] : memref<14x22x128xf32, #tpu.memory_space<vmem>>, vector<1x16x128xf32>
      %393 = vector.shape_cast %392 : vector<1x16x128xf32> to vector<16x128xf32>
      %394 = vector.broadcast %391 : f32 to vector<16x128xf32>
      %395 = arith.mulf %394, %393 : vector<16x128xf32>
      %396 = arith.addf %372, %395 : vector<16x128xf32>
      %c84 = arith.constant 84 : index
      %397 = memref.load %arg2[%c84] : memref<98xf32, #tpu.memory_space<smem>>
      %c7_228 = arith.constant 7 : index
      %c5_229 = arith.constant 5 : index
      %c0_230 = arith.constant 0 : index
      %398 = vector.load %arg7[%c7_228, %c5_229, %c0_230] : memref<14x22x128xf32, #tpu.memory_space<vmem>>, vector<1x16x128xf32>
      %399 = vector.shape_cast %398 : vector<1x16x128xf32> to vector<16x128xf32>
      %400 = vector.broadcast %397 : f32 to vector<16x128xf32>
      %401 = arith.mulf %400, %399 : vector<16x128xf32>
      %402 = arith.addf %378, %401 : vector<16x128xf32>
      %c91 = arith.constant 91 : index
      %403 = memref.load %arg2[%c91] : memref<98xf32, #tpu.memory_space<smem>>
      %c7_231 = arith.constant 7 : index
      %c6_232 = arith.constant 6 : index
      %c0_233 = arith.constant 0 : index
      %404 = vector.load %arg7[%c7_231, %c6_232, %c0_233] : memref<14x22x128xf32, #tpu.memory_space<vmem>>, vector<1x16x128xf32>
      %405 = vector.shape_cast %404 : vector<1x16x128xf32> to vector<16x128xf32>
      %406 = vector.broadcast %403 : f32 to vector<16x128xf32>
      %407 = arith.mulf %406, %405 : vector<16x128xf32>
      %408 = arith.addf %384, %407 : vector<16x128xf32>
      %c50 = arith.constant 50 : index
      %409 = memref.load %arg2[%c50] : memref<98xf32, #tpu.memory_space<smem>>
      %c8_234 = arith.constant 8 : index
      %c0_235 = arith.constant 0 : index
      %c0_236 = arith.constant 0 : index
      %410 = vector.load %arg7[%c8_234, %c0_235, %c0_236] : memref<14x22x128xf32, #tpu.memory_space<vmem>>, vector<1x16x128xf32>
      %411 = vector.shape_cast %410 : vector<1x16x128xf32> to vector<16x128xf32>
      %412 = vector.broadcast %409 : f32 to vector<16x128xf32>
      %413 = arith.mulf %412, %411 : vector<16x128xf32>
      %414 = arith.addf %390, %413 : vector<16x128xf32>
      %c57 = arith.constant 57 : index
      %415 = memref.load %arg2[%c57] : memref<98xf32, #tpu.memory_space<smem>>
      %c8_237 = arith.constant 8 : index
      %c1_238 = arith.constant 1 : index
      %c0_239 = arith.constant 0 : index
      %416 = vector.load %arg7[%c8_237, %c1_238, %c0_239] : memref<14x22x128xf32, #tpu.memory_space<vmem>>, vector<1x16x128xf32>
      %417 = vector.shape_cast %416 : vector<1x16x128xf32> to vector<16x128xf32>
      %418 = vector.broadcast %415 : f32 to vector<16x128xf32>
      %419 = arith.mulf %418, %417 : vector<16x128xf32>
      %420 = arith.addf %396, %419 : vector<16x128xf32>
      %c64 = arith.constant 64 : index
      %421 = memref.load %arg2[%c64] : memref<98xf32, #tpu.memory_space<smem>>
      %c8_240 = arith.constant 8 : index
      %c2_241 = arith.constant 2 : index
      %c0_242 = arith.constant 0 : index
      %422 = vector.load %arg7[%c8_240, %c2_241, %c0_242] : memref<14x22x128xf32, #tpu.memory_space<vmem>>, vector<1x16x128xf32>
      %423 = vector.shape_cast %422 : vector<1x16x128xf32> to vector<16x128xf32>
      %424 = vector.broadcast %421 : f32 to vector<16x128xf32>
      %425 = arith.mulf %424, %423 : vector<16x128xf32>
      %426 = arith.addf %402, %425 : vector<16x128xf32>
      %c71 = arith.constant 71 : index
      %427 = memref.load %arg2[%c71] : memref<98xf32, #tpu.memory_space<smem>>
      %c8_243 = arith.constant 8 : index
      %c3_244 = arith.constant 3 : index
      %c0_245 = arith.constant 0 : index
      %428 = vector.load %arg7[%c8_243, %c3_244, %c0_245] : memref<14x22x128xf32, #tpu.memory_space<vmem>>, vector<1x16x128xf32>
      %429 = vector.shape_cast %428 : vector<1x16x128xf32> to vector<16x128xf32>
      %430 = vector.broadcast %427 : f32 to vector<16x128xf32>
      %431 = arith.mulf %430, %429 : vector<16x128xf32>
      %432 = arith.addf %408, %431 : vector<16x128xf32>
      %c78 = arith.constant 78 : index
      %433 = memref.load %arg2[%c78] : memref<98xf32, #tpu.memory_space<smem>>
      %c8_246 = arith.constant 8 : index
      %c4_247 = arith.constant 4 : index
      %c0_248 = arith.constant 0 : index
      %434 = vector.load %arg7[%c8_246, %c4_247, %c0_248] : memref<14x22x128xf32, #tpu.memory_space<vmem>>, vector<1x16x128xf32>
      %435 = vector.shape_cast %434 : vector<1x16x128xf32> to vector<16x128xf32>
      %436 = vector.broadcast %433 : f32 to vector<16x128xf32>
      %437 = arith.mulf %436, %435 : vector<16x128xf32>
      %438 = arith.addf %414, %437 : vector<16x128xf32>
      %c85 = arith.constant 85 : index
      %439 = memref.load %arg2[%c85] : memref<98xf32, #tpu.memory_space<smem>>
      %c8_249 = arith.constant 8 : index
      %c5_250 = arith.constant 5 : index
      %c0_251 = arith.constant 0 : index
      %440 = vector.load %arg7[%c8_249, %c5_250, %c0_251] : memref<14x22x128xf32, #tpu.memory_space<vmem>>, vector<1x16x128xf32>
      %441 = vector.shape_cast %440 : vector<1x16x128xf32> to vector<16x128xf32>
      %442 = vector.broadcast %439 : f32 to vector<16x128xf32>
      %443 = arith.mulf %442, %441 : vector<16x128xf32>
      %444 = arith.addf %420, %443 : vector<16x128xf32>
      %c92 = arith.constant 92 : index
      %445 = memref.load %arg2[%c92] : memref<98xf32, #tpu.memory_space<smem>>
      %c8_252 = arith.constant 8 : index
      %c6_253 = arith.constant 6 : index
      %c0_254 = arith.constant 0 : index
      %446 = vector.load %arg7[%c8_252, %c6_253, %c0_254] : memref<14x22x128xf32, #tpu.memory_space<vmem>>, vector<1x16x128xf32>
      %447 = vector.shape_cast %446 : vector<1x16x128xf32> to vector<16x128xf32>
      %448 = vector.broadcast %445 : f32 to vector<16x128xf32>
      %449 = arith.mulf %448, %447 : vector<16x128xf32>
      %450 = arith.addf %426, %449 : vector<16x128xf32>
      %c51 = arith.constant 51 : index
      %451 = memref.load %arg2[%c51] : memref<98xf32, #tpu.memory_space<smem>>
      %c9_255 = arith.constant 9 : index
      %c0_256 = arith.constant 0 : index
      %c0_257 = arith.constant 0 : index
      %452 = vector.load %arg7[%c9_255, %c0_256, %c0_257] : memref<14x22x128xf32, #tpu.memory_space<vmem>>, vector<1x16x128xf32>
      %453 = vector.shape_cast %452 : vector<1x16x128xf32> to vector<16x128xf32>
      %454 = vector.broadcast %451 : f32 to vector<16x128xf32>
      %455 = arith.mulf %454, %453 : vector<16x128xf32>
      %456 = arith.addf %432, %455 : vector<16x128xf32>
      %c58 = arith.constant 58 : index
      %457 = memref.load %arg2[%c58] : memref<98xf32, #tpu.memory_space<smem>>
      %c9_258 = arith.constant 9 : index
      %c1_259 = arith.constant 1 : index
      %c0_260 = arith.constant 0 : index
      %458 = vector.load %arg7[%c9_258, %c1_259, %c0_260] : memref<14x22x128xf32, #tpu.memory_space<vmem>>, vector<1x16x128xf32>
      %459 = vector.shape_cast %458 : vector<1x16x128xf32> to vector<16x128xf32>
      %460 = vector.broadcast %457 : f32 to vector<16x128xf32>
      %461 = arith.mulf %460, %459 : vector<16x128xf32>
      %462 = arith.addf %438, %461 : vector<16x128xf32>
      %c65 = arith.constant 65 : index
      %463 = memref.load %arg2[%c65] : memref<98xf32, #tpu.memory_space<smem>>
      %c9_261 = arith.constant 9 : index
      %c2_262 = arith.constant 2 : index
      %c0_263 = arith.constant 0 : index
      %464 = vector.load %arg7[%c9_261, %c2_262, %c0_263] : memref<14x22x128xf32, #tpu.memory_space<vmem>>, vector<1x16x128xf32>
      %465 = vector.shape_cast %464 : vector<1x16x128xf32> to vector<16x128xf32>
      %466 = vector.broadcast %463 : f32 to vector<16x128xf32>
      %467 = arith.mulf %466, %465 : vector<16x128xf32>
      %468 = arith.addf %444, %467 : vector<16x128xf32>
      %c72 = arith.constant 72 : index
      %469 = memref.load %arg2[%c72] : memref<98xf32, #tpu.memory_space<smem>>
      %c9_264 = arith.constant 9 : index
      %c3_265 = arith.constant 3 : index
      %c0_266 = arith.constant 0 : index
      %470 = vector.load %arg7[%c9_264, %c3_265, %c0_266] : memref<14x22x128xf32, #tpu.memory_space<vmem>>, vector<1x16x128xf32>
      %471 = vector.shape_cast %470 : vector<1x16x128xf32> to vector<16x128xf32>
      %472 = vector.broadcast %469 : f32 to vector<16x128xf32>
      %473 = arith.mulf %472, %471 : vector<16x128xf32>
      %474 = arith.addf %450, %473 : vector<16x128xf32>
      %c79 = arith.constant 79 : index
      %475 = memref.load %arg2[%c79] : memref<98xf32, #tpu.memory_space<smem>>
      %c9_267 = arith.constant 9 : index
      %c4_268 = arith.constant 4 : index
      %c0_269 = arith.constant 0 : index
      %476 = vector.load %arg7[%c9_267, %c4_268, %c0_269] : memref<14x22x128xf32, #tpu.memory_space<vmem>>, vector<1x16x128xf32>
      %477 = vector.shape_cast %476 : vector<1x16x128xf32> to vector<16x128xf32>
      %478 = vector.broadcast %475 : f32 to vector<16x128xf32>
      %479 = arith.mulf %478, %477 : vector<16x128xf32>
      %480 = arith.addf %456, %479 : vector<16x128xf32>
      %c86 = arith.constant 86 : index
      %481 = memref.load %arg2[%c86] : memref<98xf32, #tpu.memory_space<smem>>
      %c9_270 = arith.constant 9 : index
      %c5_271 = arith.constant 5 : index
      %c0_272 = arith.constant 0 : index
      %482 = vector.load %arg7[%c9_270, %c5_271, %c0_272] : memref<14x22x128xf32, #tpu.memory_space<vmem>>, vector<1x16x128xf32>
      %483 = vector.shape_cast %482 : vector<1x16x128xf32> to vector<16x128xf32>
      %484 = vector.broadcast %481 : f32 to vector<16x128xf32>
      %485 = arith.mulf %484, %483 : vector<16x128xf32>
      %486 = arith.addf %462, %485 : vector<16x128xf32>
      %c93 = arith.constant 93 : index
      %487 = memref.load %arg2[%c93] : memref<98xf32, #tpu.memory_space<smem>>
      %c9_273 = arith.constant 9 : index
      %c6_274 = arith.constant 6 : index
      %c0_275 = arith.constant 0 : index
      %488 = vector.load %arg7[%c9_273, %c6_274, %c0_275] : memref<14x22x128xf32, #tpu.memory_space<vmem>>, vector<1x16x128xf32>
      %489 = vector.shape_cast %488 : vector<1x16x128xf32> to vector<16x128xf32>
      %490 = vector.broadcast %487 : f32 to vector<16x128xf32>
      %491 = arith.mulf %490, %489 : vector<16x128xf32>
      %492 = arith.addf %468, %491 : vector<16x128xf32>
      %c52 = arith.constant 52 : index
      %493 = memref.load %arg2[%c52] : memref<98xf32, #tpu.memory_space<smem>>
      %c10_276 = arith.constant 10 : index
      %c0_277 = arith.constant 0 : index
      %c0_278 = arith.constant 0 : index
      %494 = vector.load %arg7[%c10_276, %c0_277, %c0_278] : memref<14x22x128xf32, #tpu.memory_space<vmem>>, vector<1x16x128xf32>
      %495 = vector.shape_cast %494 : vector<1x16x128xf32> to vector<16x128xf32>
      %496 = vector.broadcast %493 : f32 to vector<16x128xf32>
      %497 = arith.mulf %496, %495 : vector<16x128xf32>
      %498 = arith.addf %474, %497 : vector<16x128xf32>
      %c59 = arith.constant 59 : index
      %499 = memref.load %arg2[%c59] : memref<98xf32, #tpu.memory_space<smem>>
      %c10_279 = arith.constant 10 : index
      %c1_280 = arith.constant 1 : index
      %c0_281 = arith.constant 0 : index
      %500 = vector.load %arg7[%c10_279, %c1_280, %c0_281] : memref<14x22x128xf32, #tpu.memory_space<vmem>>, vector<1x16x128xf32>
      %501 = vector.shape_cast %500 : vector<1x16x128xf32> to vector<16x128xf32>
      %502 = vector.broadcast %499 : f32 to vector<16x128xf32>
      %503 = arith.mulf %502, %501 : vector<16x128xf32>
      %504 = arith.addf %480, %503 : vector<16x128xf32>
      %c66 = arith.constant 66 : index
      %505 = memref.load %arg2[%c66] : memref<98xf32, #tpu.memory_space<smem>>
      %c10_282 = arith.constant 10 : index
      %c2_283 = arith.constant 2 : index
      %c0_284 = arith.constant 0 : index
      %506 = vector.load %arg7[%c10_282, %c2_283, %c0_284] : memref<14x22x128xf32, #tpu.memory_space<vmem>>, vector<1x16x128xf32>
      %507 = vector.shape_cast %506 : vector<1x16x128xf32> to vector<16x128xf32>
      %508 = vector.broadcast %505 : f32 to vector<16x128xf32>
      %509 = arith.mulf %508, %507 : vector<16x128xf32>
      %510 = arith.addf %486, %509 : vector<16x128xf32>
      %c73 = arith.constant 73 : index
      %511 = memref.load %arg2[%c73] : memref<98xf32, #tpu.memory_space<smem>>
      %c10_285 = arith.constant 10 : index
      %c3_286 = arith.constant 3 : index
      %c0_287 = arith.constant 0 : index
      %512 = vector.load %arg7[%c10_285, %c3_286, %c0_287] : memref<14x22x128xf32, #tpu.memory_space<vmem>>, vector<1x16x128xf32>
      %513 = vector.shape_cast %512 : vector<1x16x128xf32> to vector<16x128xf32>
      %514 = vector.broadcast %511 : f32 to vector<16x128xf32>
      %515 = arith.mulf %514, %513 : vector<16x128xf32>
      %516 = arith.addf %492, %515 : vector<16x128xf32>
      %c80 = arith.constant 80 : index
      %517 = memref.load %arg2[%c80] : memref<98xf32, #tpu.memory_space<smem>>
      %c10_288 = arith.constant 10 : index
      %c4_289 = arith.constant 4 : index
      %c0_290 = arith.constant 0 : index
      %518 = vector.load %arg7[%c10_288, %c4_289, %c0_290] : memref<14x22x128xf32, #tpu.memory_space<vmem>>, vector<1x16x128xf32>
      %519 = vector.shape_cast %518 : vector<1x16x128xf32> to vector<16x128xf32>
      %520 = vector.broadcast %517 : f32 to vector<16x128xf32>
      %521 = arith.mulf %520, %519 : vector<16x128xf32>
      %522 = arith.addf %498, %521 : vector<16x128xf32>
      %c87 = arith.constant 87 : index
      %523 = memref.load %arg2[%c87] : memref<98xf32, #tpu.memory_space<smem>>
      %c10_291 = arith.constant 10 : index
      %c5_292 = arith.constant 5 : index
      %c0_293 = arith.constant 0 : index
      %524 = vector.load %arg7[%c10_291, %c5_292, %c0_293] : memref<14x22x128xf32, #tpu.memory_space<vmem>>, vector<1x16x128xf32>
      %525 = vector.shape_cast %524 : vector<1x16x128xf32> to vector<16x128xf32>
      %526 = vector.broadcast %523 : f32 to vector<16x128xf32>
      %527 = arith.mulf %526, %525 : vector<16x128xf32>
      %528 = arith.addf %504, %527 : vector<16x128xf32>
      %c94 = arith.constant 94 : index
      %529 = memref.load %arg2[%c94] : memref<98xf32, #tpu.memory_space<smem>>
      %c10_294 = arith.constant 10 : index
      %c6_295 = arith.constant 6 : index
      %c0_296 = arith.constant 0 : index
      %530 = vector.load %arg7[%c10_294, %c6_295, %c0_296] : memref<14x22x128xf32, #tpu.memory_space<vmem>>, vector<1x16x128xf32>
      %531 = vector.shape_cast %530 : vector<1x16x128xf32> to vector<16x128xf32>
      %532 = vector.broadcast %529 : f32 to vector<16x128xf32>
      %533 = arith.mulf %532, %531 : vector<16x128xf32>
      %534 = arith.addf %510, %533 : vector<16x128xf32>
      %c53 = arith.constant 53 : index
      %535 = memref.load %arg2[%c53] : memref<98xf32, #tpu.memory_space<smem>>
      %c11_297 = arith.constant 11 : index
      %c0_298 = arith.constant 0 : index
      %c0_299 = arith.constant 0 : index
      %536 = vector.load %arg7[%c11_297, %c0_298, %c0_299] : memref<14x22x128xf32, #tpu.memory_space<vmem>>, vector<1x16x128xf32>
      %537 = vector.shape_cast %536 : vector<1x16x128xf32> to vector<16x128xf32>
      %538 = vector.broadcast %535 : f32 to vector<16x128xf32>
      %539 = arith.mulf %538, %537 : vector<16x128xf32>
      %540 = arith.addf %516, %539 : vector<16x128xf32>
      %c60 = arith.constant 60 : index
      %541 = memref.load %arg2[%c60] : memref<98xf32, #tpu.memory_space<smem>>
      %c11_300 = arith.constant 11 : index
      %c1_301 = arith.constant 1 : index
      %c0_302 = arith.constant 0 : index
      %542 = vector.load %arg7[%c11_300, %c1_301, %c0_302] : memref<14x22x128xf32, #tpu.memory_space<vmem>>, vector<1x16x128xf32>
      %543 = vector.shape_cast %542 : vector<1x16x128xf32> to vector<16x128xf32>
      %544 = vector.broadcast %541 : f32 to vector<16x128xf32>
      %545 = arith.mulf %544, %543 : vector<16x128xf32>
      %546 = arith.addf %522, %545 : vector<16x128xf32>
      %c67 = arith.constant 67 : index
      %547 = memref.load %arg2[%c67] : memref<98xf32, #tpu.memory_space<smem>>
      %c11_303 = arith.constant 11 : index
      %c2_304 = arith.constant 2 : index
      %c0_305 = arith.constant 0 : index
      %548 = vector.load %arg7[%c11_303, %c2_304, %c0_305] : memref<14x22x128xf32, #tpu.memory_space<vmem>>, vector<1x16x128xf32>
      %549 = vector.shape_cast %548 : vector<1x16x128xf32> to vector<16x128xf32>
      %550 = vector.broadcast %547 : f32 to vector<16x128xf32>
      %551 = arith.mulf %550, %549 : vector<16x128xf32>
      %552 = arith.addf %528, %551 : vector<16x128xf32>
      %c74 = arith.constant 74 : index
      %553 = memref.load %arg2[%c74] : memref<98xf32, #tpu.memory_space<smem>>
      %c11_306 = arith.constant 11 : index
      %c3_307 = arith.constant 3 : index
      %c0_308 = arith.constant 0 : index
      %554 = vector.load %arg7[%c11_306, %c3_307, %c0_308] : memref<14x22x128xf32, #tpu.memory_space<vmem>>, vector<1x16x128xf32>
      %555 = vector.shape_cast %554 : vector<1x16x128xf32> to vector<16x128xf32>
      %556 = vector.broadcast %553 : f32 to vector<16x128xf32>
      %557 = arith.mulf %556, %555 : vector<16x128xf32>
      %558 = arith.addf %534, %557 : vector<16x128xf32>
      %c81 = arith.constant 81 : index
      %559 = memref.load %arg2[%c81] : memref<98xf32, #tpu.memory_space<smem>>
      %c11_309 = arith.constant 11 : index
      %c4_310 = arith.constant 4 : index
      %c0_311 = arith.constant 0 : index
      %560 = vector.load %arg7[%c11_309, %c4_310, %c0_311] : memref<14x22x128xf32, #tpu.memory_space<vmem>>, vector<1x16x128xf32>
      %561 = vector.shape_cast %560 : vector<1x16x128xf32> to vector<16x128xf32>
      %562 = vector.broadcast %559 : f32 to vector<16x128xf32>
      %563 = arith.mulf %562, %561 : vector<16x128xf32>
      %564 = arith.addf %540, %563 : vector<16x128xf32>
      %c88 = arith.constant 88 : index
      %565 = memref.load %arg2[%c88] : memref<98xf32, #tpu.memory_space<smem>>
      %c11_312 = arith.constant 11 : index
      %c5_313 = arith.constant 5 : index
      %c0_314 = arith.constant 0 : index
      %566 = vector.load %arg7[%c11_312, %c5_313, %c0_314] : memref<14x22x128xf32, #tpu.memory_space<vmem>>, vector<1x16x128xf32>
      %567 = vector.shape_cast %566 : vector<1x16x128xf32> to vector<16x128xf32>
      %568 = vector.broadcast %565 : f32 to vector<16x128xf32>
      %569 = arith.mulf %568, %567 : vector<16x128xf32>
      %570 = arith.addf %546, %569 : vector<16x128xf32>
      %c95 = arith.constant 95 : index
      %571 = memref.load %arg2[%c95] : memref<98xf32, #tpu.memory_space<smem>>
      %c11_315 = arith.constant 11 : index
      %c6_316 = arith.constant 6 : index
      %c0_317 = arith.constant 0 : index
      %572 = vector.load %arg7[%c11_315, %c6_316, %c0_317] : memref<14x22x128xf32, #tpu.memory_space<vmem>>, vector<1x16x128xf32>
      %573 = vector.shape_cast %572 : vector<1x16x128xf32> to vector<16x128xf32>
      %574 = vector.broadcast %571 : f32 to vector<16x128xf32>
      %575 = arith.mulf %574, %573 : vector<16x128xf32>
      %576 = arith.addf %552, %575 : vector<16x128xf32>
      %c54 = arith.constant 54 : index
      %577 = memref.load %arg2[%c54] : memref<98xf32, #tpu.memory_space<smem>>
      %c12_318 = arith.constant 12 : index
      %c0_319 = arith.constant 0 : index
      %c0_320 = arith.constant 0 : index
      %578 = vector.load %arg7[%c12_318, %c0_319, %c0_320] : memref<14x22x128xf32, #tpu.memory_space<vmem>>, vector<1x16x128xf32>
      %579 = vector.shape_cast %578 : vector<1x16x128xf32> to vector<16x128xf32>
      %580 = vector.broadcast %577 : f32 to vector<16x128xf32>
      %581 = arith.mulf %580, %579 : vector<16x128xf32>
      %582 = arith.addf %558, %581 : vector<16x128xf32>
      %c61 = arith.constant 61 : index
      %583 = memref.load %arg2[%c61] : memref<98xf32, #tpu.memory_space<smem>>
      %c12_321 = arith.constant 12 : index
      %c1_322 = arith.constant 1 : index
      %c0_323 = arith.constant 0 : index
      %584 = vector.load %arg7[%c12_321, %c1_322, %c0_323] : memref<14x22x128xf32, #tpu.memory_space<vmem>>, vector<1x16x128xf32>
      %585 = vector.shape_cast %584 : vector<1x16x128xf32> to vector<16x128xf32>
      %586 = vector.broadcast %583 : f32 to vector<16x128xf32>
      %587 = arith.mulf %586, %585 : vector<16x128xf32>
      %588 = arith.addf %564, %587 : vector<16x128xf32>
      %c68 = arith.constant 68 : index
      %589 = memref.load %arg2[%c68] : memref<98xf32, #tpu.memory_space<smem>>
      %c12_324 = arith.constant 12 : index
      %c2_325 = arith.constant 2 : index
      %c0_326 = arith.constant 0 : index
      %590 = vector.load %arg7[%c12_324, %c2_325, %c0_326] : memref<14x22x128xf32, #tpu.memory_space<vmem>>, vector<1x16x128xf32>
      %591 = vector.shape_cast %590 : vector<1x16x128xf32> to vector<16x128xf32>
      %592 = vector.broadcast %589 : f32 to vector<16x128xf32>
      %593 = arith.mulf %592, %591 : vector<16x128xf32>
      %594 = arith.addf %570, %593 : vector<16x128xf32>
      %c75 = arith.constant 75 : index
      %595 = memref.load %arg2[%c75] : memref<98xf32, #tpu.memory_space<smem>>
      %c12_327 = arith.constant 12 : index
      %c3_328 = arith.constant 3 : index
      %c0_329 = arith.constant 0 : index
      %596 = vector.load %arg7[%c12_327, %c3_328, %c0_329] : memref<14x22x128xf32, #tpu.memory_space<vmem>>, vector<1x16x128xf32>
      %597 = vector.shape_cast %596 : vector<1x16x128xf32> to vector<16x128xf32>
      %598 = vector.broadcast %595 : f32 to vector<16x128xf32>
      %599 = arith.mulf %598, %597 : vector<16x128xf32>
      %600 = arith.addf %576, %599 : vector<16x128xf32>
      %c82 = arith.constant 82 : index
      %601 = memref.load %arg2[%c82] : memref<98xf32, #tpu.memory_space<smem>>
      %c12_330 = arith.constant 12 : index
      %c4_331 = arith.constant 4 : index
      %c0_332 = arith.constant 0 : index
      %602 = vector.load %arg7[%c12_330, %c4_331, %c0_332] : memref<14x22x128xf32, #tpu.memory_space<vmem>>, vector<1x16x128xf32>
      %603 = vector.shape_cast %602 : vector<1x16x128xf32> to vector<16x128xf32>
      %604 = vector.broadcast %601 : f32 to vector<16x128xf32>
      %605 = arith.mulf %604, %603 : vector<16x128xf32>
      %606 = arith.addf %582, %605 : vector<16x128xf32>
      %c89 = arith.constant 89 : index
      %607 = memref.load %arg2[%c89] : memref<98xf32, #tpu.memory_space<smem>>
      %c12_333 = arith.constant 12 : index
      %c5_334 = arith.constant 5 : index
      %c0_335 = arith.constant 0 : index
      %608 = vector.load %arg7[%c12_333, %c5_334, %c0_335] : memref<14x22x128xf32, #tpu.memory_space<vmem>>, vector<1x16x128xf32>
      %609 = vector.shape_cast %608 : vector<1x16x128xf32> to vector<16x128xf32>
      %610 = vector.broadcast %607 : f32 to vector<16x128xf32>
      %611 = arith.mulf %610, %609 : vector<16x128xf32>
      %612 = arith.addf %588, %611 : vector<16x128xf32>
      %c96 = arith.constant 96 : index
      %613 = memref.load %arg2[%c96] : memref<98xf32, #tpu.memory_space<smem>>
      %c12_336 = arith.constant 12 : index
      %c6_337 = arith.constant 6 : index
      %c0_338 = arith.constant 0 : index
      %614 = vector.load %arg7[%c12_336, %c6_337, %c0_338] : memref<14x22x128xf32, #tpu.memory_space<vmem>>, vector<1x16x128xf32>
      %615 = vector.shape_cast %614 : vector<1x16x128xf32> to vector<16x128xf32>
      %616 = vector.broadcast %613 : f32 to vector<16x128xf32>
      %617 = arith.mulf %616, %615 : vector<16x128xf32>
      %618 = arith.addf %594, %617 : vector<16x128xf32>
      %c55 = arith.constant 55 : index
      %619 = memref.load %arg2[%c55] : memref<98xf32, #tpu.memory_space<smem>>
      %c13_339 = arith.constant 13 : index
      %c0_340 = arith.constant 0 : index
      %c0_341 = arith.constant 0 : index
      %620 = vector.load %arg7[%c13_339, %c0_340, %c0_341] : memref<14x22x128xf32, #tpu.memory_space<vmem>>, vector<1x16x128xf32>
      %621 = vector.shape_cast %620 : vector<1x16x128xf32> to vector<16x128xf32>
      %622 = vector.broadcast %619 : f32 to vector<16x128xf32>
      %623 = arith.mulf %622, %621 : vector<16x128xf32>
      %624 = arith.addf %600, %623 : vector<16x128xf32>
      %c62 = arith.constant 62 : index
      %625 = memref.load %arg2[%c62] : memref<98xf32, #tpu.memory_space<smem>>
      %c13_342 = arith.constant 13 : index
      %c1_343 = arith.constant 1 : index
      %c0_344 = arith.constant 0 : index
      %626 = vector.load %arg7[%c13_342, %c1_343, %c0_344] : memref<14x22x128xf32, #tpu.memory_space<vmem>>, vector<1x16x128xf32>
      %627 = vector.shape_cast %626 : vector<1x16x128xf32> to vector<16x128xf32>
      %628 = vector.broadcast %625 : f32 to vector<16x128xf32>
      %629 = arith.mulf %628, %627 : vector<16x128xf32>
      %630 = arith.addf %606, %629 : vector<16x128xf32>
      %c69 = arith.constant 69 : index
      %631 = memref.load %arg2[%c69] : memref<98xf32, #tpu.memory_space<smem>>
      %c13_345 = arith.constant 13 : index
      %c2_346 = arith.constant 2 : index
      %c0_347 = arith.constant 0 : index
      %632 = vector.load %arg7[%c13_345, %c2_346, %c0_347] : memref<14x22x128xf32, #tpu.memory_space<vmem>>, vector<1x16x128xf32>
      %633 = vector.shape_cast %632 : vector<1x16x128xf32> to vector<16x128xf32>
      %634 = vector.broadcast %631 : f32 to vector<16x128xf32>
      %635 = arith.mulf %634, %633 : vector<16x128xf32>
      %636 = arith.addf %612, %635 : vector<16x128xf32>
      %c76 = arith.constant 76 : index
      %637 = memref.load %arg2[%c76] : memref<98xf32, #tpu.memory_space<smem>>
      %c13_348 = arith.constant 13 : index
      %c3_349 = arith.constant 3 : index
      %c0_350 = arith.constant 0 : index
      %638 = vector.load %arg7[%c13_348, %c3_349, %c0_350] : memref<14x22x128xf32, #tpu.memory_space<vmem>>, vector<1x16x128xf32>
      %639 = vector.shape_cast %638 : vector<1x16x128xf32> to vector<16x128xf32>
      %640 = vector.broadcast %637 : f32 to vector<16x128xf32>
      %641 = arith.mulf %640, %639 : vector<16x128xf32>
      %642 = arith.addf %618, %641 : vector<16x128xf32>
      %c83 = arith.constant 83 : index
      %643 = memref.load %arg2[%c83] : memref<98xf32, #tpu.memory_space<smem>>
      %c13_351 = arith.constant 13 : index
      %c4_352 = arith.constant 4 : index
      %c0_353 = arith.constant 0 : index
      %644 = vector.load %arg7[%c13_351, %c4_352, %c0_353] : memref<14x22x128xf32, #tpu.memory_space<vmem>>, vector<1x16x128xf32>
      %645 = vector.shape_cast %644 : vector<1x16x128xf32> to vector<16x128xf32>
      %646 = vector.broadcast %643 : f32 to vector<16x128xf32>
      %647 = arith.mulf %646, %645 : vector<16x128xf32>
      %648 = arith.addf %624, %647 : vector<16x128xf32>
      %c90 = arith.constant 90 : index
      %649 = memref.load %arg2[%c90] : memref<98xf32, #tpu.memory_space<smem>>
      %c13_354 = arith.constant 13 : index
      %c5_355 = arith.constant 5 : index
      %c0_356 = arith.constant 0 : index
      %650 = vector.load %arg7[%c13_354, %c5_355, %c0_356] : memref<14x22x128xf32, #tpu.memory_space<vmem>>, vector<1x16x128xf32>
      %651 = vector.shape_cast %650 : vector<1x16x128xf32> to vector<16x128xf32>
      %652 = vector.broadcast %649 : f32 to vector<16x128xf32>
      %653 = arith.mulf %652, %651 : vector<16x128xf32>
      %654 = arith.addf %630, %653 : vector<16x128xf32>
      %c97 = arith.constant 97 : index
      %655 = memref.load %arg2[%c97] : memref<98xf32, #tpu.memory_space<smem>>
      %c13_357 = arith.constant 13 : index
      %c6_358 = arith.constant 6 : index
      %c0_359 = arith.constant 0 : index
      %656 = vector.load %arg7[%c13_357, %c6_358, %c0_359] : memref<14x22x128xf32, #tpu.memory_space<vmem>>, vector<1x16x128xf32>
      %657 = vector.shape_cast %656 : vector<1x16x128xf32> to vector<16x128xf32>
      %658 = vector.broadcast %655 : f32 to vector<16x128xf32>
      %659 = arith.mulf %658, %657 : vector<16x128xf32>
      %660 = arith.addf %636, %659 : vector<16x128xf32>
      %661 = arith.addf %654, %660 : vector<16x128xf32>
      %662 = arith.addf %642, %648 : vector<16x128xf32>
      %663 = arith.addf %661, %662 : vector<16x128xf32>
      %664 = arith.negf %663 : vector<16x128xf32>
      %665 = math.exp %664 : vector<16x128xf32>
      %cst_360 = arith.constant 1.000000e+00 : f32
      %666 = vector.broadcast %cst_360 : f32 to vector<16x128xf32>
      %667 = arith.addf %666, %665 : vector<16x128xf32>
      %668 = arith.divf %666, %667 : vector<16x128xf32>
      %c0_361 = arith.constant 0 : index
      %c0_362 = arith.constant 0 : index
      %c0_363 = arith.constant 0 : index
      %669 = vector.load %arg4[%c0_361, %c0_362, %c0_363] : memref<1x16x128xf32, #tpu.memory_space<vmem>>, vector<1x16x128xf32>
      %670 = vector.shape_cast %669 : vector<1x16x128xf32> to vector<16x128xf32>
      %671 = vector.shape_cast %668 : vector<16x128xf32> to vector<1x16x128xf32>
      tpu.vector_store %arg4[%c0_361, %c0_362, %c0_363], %671 {strides = array<i32>} : memref<1x16x128xf32, #tpu.memory_space<vmem>>, vector<1x16x128xf32>,
    } else {
    }
    return
  }
  func.func @transform_0(%arg0: i32, %arg1: i32) -> i32 {
    %c0_i32 = arith.constant 0 : i32
    %c0_i32_0 = arith.constant 0 : i32
    return %c0_i32 : i32
  }
  func.func @transform_1(%arg0: i32, %arg1: i32) -> (i32, i32, i32, i32) {
    %c0_i32 = arith.constant 0 : i32
    %c0_i32_0 = arith.constant 0 : i32
    %c0_i32_1 = arith.constant 0 : i32
    return %arg0, %arg1, %c0_i32, %c0_i32_0 : i32, i32, i32, i32
  }
  func.func @transform_2(%arg0: i32, %arg1: i32) -> (i32, i32, i32) {
    %c0_i32 = arith.constant 0 : i32
    %c0_i32_0 = arith.constant 0 : i32
    %c0_i32_1 = arith.constant 0 : i32
    return %arg0, %c0_i32, %c0_i32_0 : i32, i32, i32
  }
}

</mosaic_0001>

<llo_original>
// kernel: tpu_custom_call.1
$region0: #{tpu_custom_call.1}
  #allocation0 [shape = 'u32[]', space=smem, size = 0x4, offset = 0x4, fixed_abs, tag = 'smem constant byte address 0x4 - core index']
  #allocation1 [shape = 'u32[72,128]{1,0:T(1,128)}', space=vmem, size = 0x9000, scoped, tag = 'internal scratch']
  #allocation2 [shape = 'f32[22,128]{1,0:T(8,128)}', space=vmem, size = 0x3000, scoped, tag = 'scratch operand']
  #allocation3 [shape = 'f32[22,128]{1,0:T(8,128)}', space=vmem, size = 0x3000, scoped, tag = 'scratch operand']
  #allocation4 [shape = 'f32[14,22,128]{2,1,0:T(8,128)}', space=vmem, size = 0x2a000, scoped, tag = 'scratch operand']
  %s0 = inlined_call_operand.hbm [shape: f32[98], index: 0, kind: input, shape index: {}]
  %s1 = inlined_call_operand.hbm [shape: f32[2,4,16,16], index: 1, kind: input, shape index: {}]
  %s2 = inlined_call_operand.hbm [shape: f32[2,16,128], index: 2, kind: output, shape index: {}]
  %s3 = sld [smem:[#allocation0]]
  $region61: #{tpu_custom_call.1} parent=0
    _
  %s5 = ssub.s32 1, %s3
  %s6 = scalar_select 0, %s5, %s3
  $region1: #{tpu_custom_call.1} parent=0
    #allocation5 [shape = 'u8[512]{0}', space=smem, size = 0x200, scoped, tag = 'input window, operand 0, single buffered']
    #allocation6 [shape = 's32[2]{0}', space=sflag, size = 0x8, scoped, tag = 'scoped memory for tpu_custom_call.1']
    #allocation7 [shape = 's32[2]{0}', space=sflag, size = 0x8, scoped, tag = 'scoped memory for tpu_custom_call.1']
    #allocation8 [shape = 's32[2]{0}', space=sflag, size = 0x8, scoped, tag = 'scoped memory for tpu_custom_call.1']
    #allocation9 [shape = 'u8[65536]{0}', space=vmem, size = 0x10000, scoped, tag = 'input window, operand 1']
    #allocation10 [shape = 'u8[16384]{0}', space=vmem, size = 0x4000, scoped, tag = 'output window, operand 0']
    %7 = vsyncpa [#allocation8], 0
    %8 = vsyncpa [#allocation6], 0
    %s9 = scalar_lea.sflag [#allocation6], 1
    %10 = vsyncpa %s9, 0
    %11 = vsyncpa [#allocation7], 0
    %s12 = scalar_lea.sflag [#allocation7], 1
    %13 = vsyncpa %s12, 0
    loop: start=0, step=1, limit=4
    $region2: #{tpu_custom_call.1} parent=1 // loop_pre_header
      _
    $region3: #{tpu_custom_call.1} parent=1 // loop_header
      %s15 = sphi 0, %s19
      %p16 = scmp.ge.s32.totalorder %s15, 4
      %s22 = sphi 0, %s34
      %s23 = sphi 0, %s30
      %s24 = sphi 0, %s22
      %s25 = sphi 0, %s23
      %s26 = sphi 0, %s24
      %s27 = sphi 0, %s25
      %s35 = sphi 0, %s35
      %s37 = sphi 0, %s35
      %s38 = sphi 0, %s37
      %s52 = sphi 0, %s38
      %s60 = sphi 0, %s62
      %s63 = sphi 0, %s60
      %s64 = sphi 0, %s63
      %s80 = sphi 0, %s64
      %s86 = sphi 0, %s88
      %s89 = sphi 0, %s86
      %s90 = sphi 0, %s89
      %s106 = sphi 0, %s90
    $region4: #{tpu_custom_call.1} parent=1 // loop_header_branch
      %18 = sbr.rel (%p16) target = $region8
    $region5: #{tpu_custom_call.1} parent=1 // loop_body
      %s20 = ssub.s32 %s15, 1
      %s21 = ssub.s32 %s15, 2
      %s28 = sadd.s32 1, %s23
      %p29 = scmp.ge.s32.totalorder %s28, 1
      %s30 = scalar_select %p29, 0, %s28
      %s31 = sadd.s32 1, %s22
      %s32 = scalar_select %p29, %s31, %s22
      %p33 = scmp.ge.s32.totalorder %s32, 2
      %s34 = scalar_select %p33, 0, %s32
      %s36 = sadd.s32 %s35, 1
      %p39 = scmp.eq.s32.totalorder %s15, 1
      %p40 = scmp.ne.s32.totalorder %s35, %s37
      %p41 = scmp.eq.s32.totalorder %s15, 0
      %p42 = por %p40, %p41
      %p43 = scmp.ne.s32.totalorder %s35, %s37
      %p44 = scmp.eq.s32.totalorder %s20, 1
      %p45 = por %p43, %p44
      %p46 = scmp.ne.s32.totalorder %s37, %s38
      %p47 = scmp.eq.s32.totalorder %s20, 0
      %p48 = por %p46, %p47
      %p49 = scmp.ne.s32.totalorder %s37, %s38
      %p50 = scmp.eq.s32.totalorder %s21, 1
      %p51 = por %p49, %p50
      %p53 = scmp.ne.s32.totalorder %s38, %s52
      %p54 = scmp.eq.s32.totalorder %s21, 0
      %p55 = por %p53, %p54
      %s56 = ssub.s32 %s22, %s34
      %s57 = ssub.s32 %s23, %s30
      %s58 = sor.u32 %s56, %s57
      %p59 = scmp.eq.s32.totalorder %s58, 0
      %s61 = sadd.s32 %s60, 1
      %s62 = scalar_select %p59, %s60, %s61
      %p65 = pneg %p59
      %p66 = scmp.eq.s32.totalorder %s15, 1
      %p67 = por %p65, %p66
      %p68 = scmp.ne.s32.totalorder %s60, %s63
      %p69 = scmp.eq.s32.totalorder %s15, 0
      %p70 = por %p68, %p69
      %p71 = scmp.ne.s32.totalorder %s60, %s63
      %p72 = scmp.eq.s32.totalorder %s20, 1
      %p73 = por %p71, %p72
      %p74 = scmp.ne.s32.totalorder %s63, %s64
      %p75 = scmp.eq.s32.totalorder %s20, 0
      %p76 = por %p74, %p75
      %p77 = scmp.ne.s32.totalorder %s63, %s64
      %p78 = scmp.eq.s32.totalorder %s21, 1
      %p79 = por %p77, %p78
      %p81 = scmp.ne.s32.totalorder %s64, %s80
      %p82 = scmp.eq.s32.totalorder %s21, 0
      %p83 = por %p81, %p82
      %s84 = ssub.s32 %s22, %s34
      %p85 = scmp.eq.s32.totalorder %s84, 0
      %s87 = sadd.s32 %s86, 1
      %s88 = scalar_select %p85, %s86, %s87
      %p91 = pneg %p85
      %p92 = scmp.eq.s32.totalorder %s15, 1
      %p93 = por %p91, %p92
      %p94 = scmp.ne.s32.totalorder %s86, %s89
      %p95 = scmp.eq.s32.totalorder %s15, 0
      %p96 = por %p94, %p95
      %p97 = scmp.ne.s32.totalorder %s86, %s89
      %p98 = scmp.eq.s32.totalorder %s20, 1
      %p99 = por %p97, %p98
      %p100 = scmp.ne.s32.totalorder %s89, %s90
      %p101 = scmp.eq.s32.totalorder %s20, 0
      %p102 = por %p100, %p101
      %p103 = scmp.ne.s32.totalorder %s89, %s90
      %p104 = scmp.eq.s32.totalorder %s21, 1
      %p105 = por %p103, %p104
      %p107 = scmp.ne.s32.totalorder %s90, %s106
      %p108 = scmp.eq.s32.totalorder %s21, 0
      %p109 = por %p107, %p108
      %p110 = scmp.le.s32.totalorder 1, %s15
      %p111 = scmp.lt.s32.totalorder %s15, 3
      %p112 = pnand %p110, %p111
      %p113 = pneg %p112
      // Predicated region
      $region9: #{tpu_custom_call.1} parent=5 // pred_check
        _
      $region10: #{tpu_custom_call.1} parent=5 // pred_check_branch
        %115 = sbr.rel (%p112) target = $region12
      $region11: #{tpu_custom_call.1} parent=5 // pred_region
        %s116 = ssub.s32 %s15, 1
        // Predicated region
        $region13: #{tpu_custom_call.1} parent=11 // pred_check
          %p117 = pneg %p48
        $region14: #{tpu_custom_call.1} parent=11 // pred_check_branch
          %119 = sbr.rel (%p117) target = $region16
        $region15: #{tpu_custom_call.1} parent=11 // pred_region
          %121 = vsyncadd [#allocation8], 0
          %s123 = sshll.u32 %s0, 4
          %s124 = int_to_ptr.hbm [resolvable:$true] %s123
          %126 = dma.hbm_to_smem %s124, 16, [#allocation5], [#allocation8]
        $region16: #{tpu_custom_call.1} parent=11 // pred_fallthru
          _
      $region12: #{tpu_custom_call.1} parent=5 // pred_fallthru
        _
      %p127 = scmp.lt.s32.totalorder %s15, 2
      // Predicated region
      $region17: #{tpu_custom_call.1} parent=5 // pred_check
        %p128 = pneg %p127
      $region18: #{tpu_custom_call.1} parent=5 // pred_check_branch
        %130 = sbr.rel (%p128) target = $region20
      $region19: #{tpu_custom_call.1} parent=5 // pred_region
        // Predicated region
        $region21: #{tpu_custom_call.1} parent=19 // pred_check
          %p131 = pneg %p70
        $region22: #{tpu_custom_call.1} parent=19 // pred_check_branch
          %133 = sbr.rel (%p131) target = $region24
        $region23: #{tpu_custom_call.1} parent=19 // pred_region
          %s134 = sand.u32 %s60, 1
          %s135 = scalar_lea.sflag [#allocation6], %s134
          %s136 = sand.u32 %s60, 1
          %s137 = smul.addr %s136, 64
          %s138 = scalar_lea.vmem [#allocation9], %s137
          %s139 = smul.u32 4, %s23
          %141 = vsyncadd %s135, 0
          %s142 = smul.addr %s139, 2
          %s143 = smul.addr %s22, 8
          %s144 = sadd.s32 %s142, %s143
          %s145 = smul.addr %s144, 8
          %s146 = scalar_lea.hbm %s1, %s145
          %s147 = sshll.u32 %s146, 4
          %s148 = int_to_ptr.hbm [resolvable:$true] %s147
          %s149 = sshll.u32 %s138, 4
          %s150 = int_to_ptr.vmem [resolvable:$true] %s149
          %155 = dma.hbm_to_vmem [thread:$0]  %s148, 1024, %s150, %s135, 128, 128, 8
        $region24: #{tpu_custom_call.1} parent=19 // pred_fallthru
          _
      $region20: #{tpu_custom_call.1} parent=5 // pred_fallthru
        _
      %p156 = scmp.le.s32.totalorder 1, %s15
      %p157 = scmp.lt.s32.totalorder %s15, 3
      %p158 = pnand %p156, %p157
      %p159 = pneg %p158
      // Predicated region
      $region25: #{tpu_custom_call.1} parent=5 // pred_check
        _
      $region26: #{tpu_custom_call.1} parent=5 // pred_check_branch
        %161 = sbr.rel (%p158) target = $region28
      $region27: #{tpu_custom_call.1} parent=5 // pred_region
        %s162 = ssub.s32 %s15, 1
        // Predicated region
        $region29: #{tpu_custom_call.1} parent=27 // pred_check
          %p163 = pneg %p48
        $region30: #{tpu_custom_call.1} parent=27 // pred_check_branch
          %165 = sbr.rel (%p163) target = $region32
        $region31: #{tpu_custom_call.1} parent=27 // pred_region
          %167 = dma.done [#allocation8], 16
        $region32: #{tpu_custom_call.1} parent=27 // pred_fallthru
          _
        %s168 = sand.u32 %s63, 1
        %s169 = scalar_lea.sflag [#allocation6], %s168
        %s170 = sand.u32 %s63, 1
        %s171 = smul.addr %s170, 64
        %s172 = scalar_lea.vmem [#allocation9], %s171
        // Predicated region
        $region33: #{tpu_custom_call.1} parent=27 // pred_check
          %p173 = pneg %p76
        $region34: #{tpu_custom_call.1} parent=27 // pred_check_branch
          %175 = sbr.rel (%p173) target = $region36
        $region35: #{tpu_custom_call.1} parent=27 // pred_region
          %177 = dma.done %s169, 1024
        $region36: #{tpu_custom_call.1} parent=27 // pred_fallthru
          _
        %178 = sfence
        %p179 = pneg %p48
        %p180 = pneg %p45
        %s181 = sand.u32 %s63, 1
        %s182 = scalar_lea.sflag [#allocation6], %s181
        %s183 = sand.u32 %s63, 1
        %s184 = smul.addr %s183, 64
        %s185 = scalar_lea.vmem [#allocation9], %s184
        %p186 = pneg %p76
        %p187 = pneg %p73
        %p188 = pneg %p102
        %p189 = pneg %p99
        %s190 = sand.u32 %s89, 1
        %s191 = scalar_lea.sflag [#allocation7], %s190
        %s192 = sand.u32 %s89, 1
        %s193 = smul.addr %s192, 16
        %s194 = scalar_lea.vmem [#allocation10], %s193
        %s195 = smul.u32 4, %s25
        %v196 = vld [vmem:[%s172] sm:$0xff]
        %v197 = vld [vmem:[%s172 + $0x8] sm:$0xff]
        %v198 = vld [vmem:[%s172 + $0x10] sm:$0xff]
        %v199 = vld [vmem:[%s172 + $0x18] sm:$0xff]
        %v200 = vld [vmem:[%s172 + $0x20] sm:$0xff]
        %v201 = vld [vmem:[%s172 + $0x28] sm:$0xff]
        %v202 = vld [vmem:[%s172 + $0x30] sm:$0xff]
        %v203 = vld [vmem:[%s172 + $0x38] sm:$0xff]
        %vm204 = vcmask 130048
        %v205 = vsel %vm204, %v196, 0.0
        %v206 = vsel %vm204, %v198, 0.0
        %v207 = vadd.f32 %v205, %v206
        %v208 = vsel %vm204, %v200, 0.0
        %v209 = vadd.f32 %v207, %v208
        %v210 = vsel %vm204, %v202, 0.0
        %v211 = vadd.f32 %v209, %v210
        %v212 = vsel %vm204, %v197, 0.0
        %v213 = vsel %vm204, %v199, 0.0
        %v214 = vadd.f32 %v212, %v213
        %v215 = vsel %vm204, %v201, 0.0
        %v216 = vadd.f32 %v214, %v215
        %v217 = vsel %vm204, %v203, 0.0
        %v218 = vadd.f32 %v216, %v217
        %v219 = vsel %vm204, %v196, -inf
        %v220 = vsel %vm204, %v198, -inf
        %v221 = vsel %vm204, %v200, -inf
        %v222 = vmax.f32 %v219, %v221
        %v223 = vsel %vm204, %v202, -inf
        %v224 = vmax.f32 %v220, %v223
        %v225 = vmax.f32 %v222, %v224
        %v226 = vsel %vm204, %v197, -inf
        %v227 = vsel %vm204, %v199, -inf
        %v228 = vsel %vm204, %v201, -inf
        %v229 = vmax.f32 %v226, %v228
        %v230 = vsel %vm204, %v203, -inf
        %v231 = vmax.f32 %v227, %v230
        %v232 = vmax.f32 %v229, %v231
        %p233 = scmp.eq.s32.totalorder %s25, 0
        // Predicated region
        $region37: #{tpu_custom_call.1} parent=27 // pred_check
          %p234 = pneg %p233
        $region38: #{tpu_custom_call.1} parent=27 // pred_check_branch
          %236 = sbr.rel (%p234) target = $region40
        $region39: #{tpu_custom_call.1} parent=27 // pred_region
          %237 = vst [vmem:[#allocation2] sm:$0xff] 0.0
          %238 = vst [vmem:[#allocation2 + $0x8] sm:$0xff] 0.0
          %239 = vst [vmem:[#allocation2 + $0x10] sm:$0x3f] 0.0
          %240 = vst [vmem:[#allocation3] sm:$0xff] 0.0
          %241 = vst [vmem:[#allocation3 + $0x8] sm:$0xff] 0.0
          %242 = vst [vmem:[#allocation3 + $0x10] sm:$0x3f] 0.0
          %243 = vst.msk [vmem:[#allocation2 + $0x3] sm:$0xff] %vm204, %v211
          %244 = vst.msk [vmem:[#allocation2 + $0xb] sm:$0xff] %vm204, %v218
          %245 = vst.msk [vmem:[#allocation3 + $0x3] sm:$0xff] %vm204, %v225
          %246 = vst.msk [vmem:[#allocation3 + $0xb] sm:$0xff] %vm204, %v232
        $region40: #{tpu_custom_call.1} parent=27 // pred_fallthru
          _
        %p247 = scmp.gt.s32.totalorder %s25, 0
        // Predicated region
        $region41: #{tpu_custom_call.1} parent=27 // pred_check
          %p248 = pneg %p247
        $region42: #{tpu_custom_call.1} parent=27 // pred_check_branch
          %250 = sbr.rel (%p248) target = $region44
        $region43: #{tpu_custom_call.1} parent=27 // pred_region
          %v251 = vld [vmem:[#allocation2 + $0x3] sm:$0xff]
          %v252 = vld [vmem:[#allocation2 + $0xb] sm:$0xff]
          %v253 = vadd.f32 %v251, %v211
          %v254 = vadd.f32 %v252, %v218
          %255 = vst.msk [vmem:[#allocation2 + $0x3] sm:$0xff] %vm204, %v253
          %256 = vst.msk [vmem:[#allocation2 + $0xb] sm:$0xff] %vm204, %v254
          %v257 = vld [vmem:[#allocation3 + $0x3] sm:$0xff]
          %v258 = vld [vmem:[#allocation3 + $0xb] sm:$0xff]
          %v259 = vmax.f32 %v257, %v225
          %v260 = vmax.f32 %v258, %v232
          %261 = vst.msk [vmem:[#allocation3 + $0x3] sm:$0xff] %vm204, %v259
          %262 = vst.msk [vmem:[#allocation3 + $0xb] sm:$0xff] %vm204, %v260
        $region44: #{tpu_custom_call.1} parent=27 // pred_fallthru
          _
        // Predicated region
        $region45: #{tpu_custom_call.1} parent=27 // pred_check
          %p263 = pneg %p233
        $region46: #{tpu_custom_call.1} parent=27 // pred_check_branch
          %265 = sbr.rel (%p263) target = $region48
        $region47: #{tpu_custom_call.1} parent=27 // pred_region
          %v266 = vld [vmem:[#allocation2] sm:$0xff]
          %v267 = vld [vmem:[#allocation2 + $0x8] sm:$0xff]
          %v268 = vld [vmem:[#allocation2 + $0x10] sm:$0x3f]
          %v269 = vld [vmem:[#allocation3] sm:$0xff]
          %v270 = vld [vmem:[#allocation3 + $0x8] sm:$0xff]
          %v271 = vld [vmem:[#allocation3 + $0x10] sm:$0x3f]
          %272 = vrot.lane.b32.xlu0 %v266, 3
          %v273 = vpop.permute.xlu0 %272
          %274 = vrot.lane.b32.xlu0 %v267, 3
          %v275 = vpop.permute.xlu0 %274
          %276 = vrot.lane.b32.xlu0 %v268, 3
          %v277 = vpop.permute.xlu0 %276
          %278 = vst [vmem:[#allocation4] sm:$0xff] %v273
          %279 = vst [vmem:[#allocation4 + $0x8] sm:$0xff] %v275
          %280 = vst [vmem:[#allocation4 + $0x10] sm:$0x3f] %v277
          %281 = vrot.lane.b32.xlu0 %v266, 2
          %v282 = vpop.permute.xlu0 %281
          %283 = vrot.lane.b32.xlu0 %v267, 2
          %v284 = vpop.permute.xlu0 %283
          %285 = vrot.lane.b32.xlu0 %v268, 2
          %v286 = vpop.permute.xlu0 %285
          %s287 = scalar_lea.vmem [#allocation4], 24
          %288 = vst [vmem:[%s287] sm:$0xff] %v282
          %289 = vst [vmem:[%s287 + $0x8] sm:$0xff] %v284
          %290 = vst [vmem:[%s287 + $0x10] sm:$0x3f] %v286
          %291 = vrot.lane.b32.xlu0 %v266, 1
          %v292 = vpop.permute.xlu0 %291
          %293 = vrot.lane.b32.xlu0 %v267, 1
          %v294 = vpop.permute.xlu0 %293
          %295 = vrot.lane.b32.xlu0 %v268, 1
          %v296 = vpop.permute.xlu0 %295
          %s297 = scalar_lea.vmem [#allocation4], 48
          %298 = vst [vmem:[%s297] sm:$0xff] %v292
          %299 = vst [vmem:[%s297 + $0x8] sm:$0xff] %v294
          %300 = vst [vmem:[%s297 + $0x10] sm:$0x3f] %v296
          %s301 = scalar_lea.vmem [#allocation4], 72
          %302 = vst [vmem:[%s301] sm:$0xff] %v266
          %303 = vst [vmem:[%s301 + $0x8] sm:$0xff] %v267
          %304 = vst [vmem:[%s301 + $0x10] sm:$0x3f] %v268
          %305 = vrot.lane.b32.xlu0 %v266, 127
          %v306 = vpop.permute.xlu0 %305
          %307 = vrot.lane.b32.xlu0 %v267, 127
          %v308 = vpop.permute.xlu0 %307
          %309 = vrot.lane.b32.xlu0 %v268, 127
          %v310 = vpop.permute.xlu0 %309
          %s311 = scalar_lea.vmem [#allocation4], 96
          %312 = vst [vmem:[%s311] sm:$0xff] %v306
          %313 = vst [vmem:[%s311 + $0x8] sm:$0xff] %v308
          %314 = vst [vmem:[%s311 + $0x10] sm:$0x3f] %v310
          %315 = vrot.lane.b32.xlu0 %v266, 126
          %v316 = vpop.permute.xlu0 %315
          %317 = vrot.lane.b32.xlu0 %v267, 126
          %v318 = vpop.permute.xlu0 %317
          %319 = vrot.lane.b32.xlu0 %v268, 126
          %v320 = vpop.permute.xlu0 %319
          %s321 = scalar_lea.vmem [#allocation4], 120
          %322 = vst [vmem:[%s321] sm:$0xff] %v316
          %323 = vst [vmem:[%s321 + $0x8] sm:$0xff] %v318
          %324 = vst [vmem:[%s321 + $0x10] sm:$0x3f] %v320
          %325 = vrot.lane.b32.xlu0 %v266, 125
          %v326 = vpop.permute.xlu0 %325
          %327 = vrot.lane.b32.xlu0 %v267, 125
          %v328 = vpop.permute.xlu0 %327
          %329 = vrot.lane.b32.xlu0 %v268, 125
          %v330 = vpop.permute.xlu0 %329
          %s331 = scalar_lea.vmem [#allocation4], 144
          %332 = vst [vmem:[%s331] sm:$0xff] %v326
          %333 = vst [vmem:[%s331 + $0x8] sm:$0xff] %v328
          %334 = vst [vmem:[%s331 + $0x10] sm:$0x3f] %v330
          %335 = vrot.lane.b32.xlu0 %v269, 3
          %v336 = vpop.permute.xlu0 %335
          %337 = vrot.lane.b32.xlu0 %v270, 3
          %v338 = vpop.permute.xlu0 %337
          %339 = vrot.lane.b32.xlu0 %v271, 3
          %v340 = vpop.permute.xlu0 %339
          %s341 = scalar_lea.vmem [#allocation4], 168
          %342 = vst [vmem:[%s341] sm:$0xff] %v336
          %343 = vst [vmem:[%s341 + $0x8] sm:$0xff] %v338
          %344 = vst [vmem:[%s341 + $0x10] sm:$0x3f] %v340
          %345 = vrot.lane.b32.xlu0 %v269, 2
          %v346 = vpop.permute.xlu0 %345
          %347 = vrot.lane.b32.xlu0 %v270, 2
          %v348 = vpop.permute.xlu0 %347
          %349 = vrot.lane.b32.xlu0 %v271, 2
          %v350 = vpop.permute.xlu0 %349
          %s351 = scalar_lea.vmem [#allocation4], 192
          %352 = vst [vmem:[%s351] sm:$0xff] %v346
          %353 = vst [vmem:[%s351 + $0x8] sm:$0xff] %v348
          %354 = vst [vmem:[%s351 + $0x10] sm:$0x3f] %v350
          %355 = vrot.lane.b32.xlu0 %v269, 1
          %v356 = vpop.permute.xlu0 %355
          %357 = vrot.lane.b32.xlu0 %v270, 1
          %v358 = vpop.permute.xlu0 %357
          %359 = vrot.lane.b32.xlu0 %v271, 1
          %v360 = vpop.permute.xlu0 %359
          %s361 = scalar_lea.vmem [#allocation4], 216
          %362 = vst [vmem:[%s361] sm:$0xff] %v356
          %363 = vst [vmem:[%s361 + $0x8] sm:$0xff] %v358
          %364 = vst [vmem:[%s361 + $0x10] sm:$0x3f] %v360
          %s365 = scalar_lea.vmem [#allocation4], 240
          %366 = vst [vmem:[%s365] sm:$0xff] %v269
          %367 = vst [vmem:[%s365 + $0x8] sm:$0xff] %v270
          %368 = vst [vmem:[%s365 + $0x10] sm:$0x3f] %v271
          %369 = vrot.lane.b32.xlu0 %v269, 127
          %v370 = vpop.permute.xlu0 %369
          %371 = vrot.lane.b32.xlu0 %v270, 127
          %v372 = vpop.permute.xlu0 %371
          %373 = vrot.lane.b32.xlu0 %v271, 127
          %v374 = vpop.permute.xlu0 %373
          %s375 = scalar_lea.vmem [#allocation4], 264
          %376 = vst [vmem:[%s375] sm:$0xff] %v370
          %377 = vst [vmem:[%s375 + $0x8] sm:$0xff] %v372
          %378 = vst [vmem:[%s375 + $0x10] sm:$0x3f] %v374
          %379 = vrot.lane.b32.xlu0 %v269, 126
          %v380 = vpop.permute.xlu0 %379
          %381 = vrot.lane.b32.xlu0 %v270, 126
          %v382 = vpop.permute.xlu0 %381
          %383 = vrot.lane.b32.xlu0 %v271, 126
          %v384 = vpop.permute.xlu0 %383
          %s385 = scalar_lea.vmem [#allocation4], 288
          %386 = vst [vmem:[%s385] sm:$0xff] %v380
          %387 = vst [vmem:[%s385 + $0x8] sm:$0xff] %v382
          %388 = vst [vmem:[%s385 + $0x10] sm:$0x3f] %v384
          %389 = vrot.lane.b32.xlu0 %v269, 125
          %v390 = vpop.permute.xlu0 %389
          %391 = vrot.lane.b32.xlu0 %v270, 125
          %v392 = vpop.permute.xlu0 %391
          %393 = vrot.lane.b32.xlu0 %v271, 125
          %v394 = vpop.permute.xlu0 %393
          %s395 = scalar_lea.vmem [#allocation4], 312
          %396 = vst [vmem:[%s395] sm:$0xff] %v390
          %397 = vst [vmem:[%s395 + $0x8] sm:$0xff] %v392
          %398 = vst [vmem:[%s395 + $0x10] sm:$0x3f] %v394
          %s399 = sld [smem:[#allocation5]]
          %v400 = vld [vmem:[#allocation4] sm:$0xff]
          %v401 = vld [vmem:[#allocation4 + $0x8] sm:$0xff]
          %v402 = vstv %s399
          %v403 = vmul.f32 %v402, %v400
          %v404 = vmul.f32 %v402, %v401
          %v405 = vadd.f32 %v403, 0.0
          %v406 = vadd.f32 %v404, 0.0
          %s407 = sld [smem:[#allocation5 + $0x7]]
          %v408 = vld [vmem:[#allocation4 + $0x1] sm:$0xff]
          %v409 = vld [vmem:[#allocation4 + $0x9] sm:$0xff]
          %v410 = vstv %s407
          %v411 = vmul.f32 %v410, %v408
          %v412 = vmul.f32 %v410, %v409
          %v413 = vadd.f32 %v411, 0.0
          %v414 = vadd.f32 %v412, 0.0
          %s415 = sld [smem:[#allocation5 + $0xe]]
          %v416 = vld [vmem:[#allocation4 + $0x2] sm:$0xff]
          %v417 = vld [vmem:[#allocation4 + $0xa] sm:$0xff]
          %v418 = vstv %s415
          %v419 = vmul.f32 %v418, %v416
          %v420 = vmul.f32 %v418, %v417
          %v421 = vadd.f32 %v419, 0.0
          %v422 = vadd.f32 %v420, 0.0
          %s423 = sld [smem:[#allocation5 + $0x15]]
          %v424 = vld [vmem:[#allocation4 + $0x3] sm:$0xff]
          %v425 = vld [vmem:[#allocation4 + $0xb] sm:$0xff]
          %v426 = vstv %s423
          %v427 = vmul.f32 %v426, %v424
          %v428 = vmul.f32 %v426, %v425
          %v429 = vadd.f32 %v427, 0.0
          %v430 = vadd.f32 %v428, 0.0
          %s431 = sld [smem:[#allocation5 + $0x1c]]
          %v432 = vld [vmem:[#allocation4 + $0x4] sm:$0xff]
          %v433 = vld [vmem:[#allocation4 + $0xc] sm:$0xff]
          %v434 = vstv %s431
          %v435 = vmul.f32 %v434, %v432
          %v436 = vmul.f32 %v434, %v433
          %v437 = vadd.f32 %v405, %v435
          %v438 = vadd.f32 %v406, %v436
          %s439 = sld [smem:[#allocation5 + $0x23]]
          %v440 = vld [vmem:[#allocation4 + $0x5] sm:$0xff]
          %v441 = vld [vmem:[#allocation4 + $0xd] sm:$0xff]
          %v442 = vstv %s439
          %v443 = vmul.f32 %v442, %v440
          %v444 = vmul.f32 %v442, %v441
          %v445 = vadd.f32 %v413, %v443
          %v446 = vadd.f32 %v414, %v444
          %s447 = sld [smem:[#allocation5 + $0x2a]]
          %v448 = vld [vmem:[#allocation4 + $0x6] sm:$0xff]
          %v449 = vld [vmem:[#allocation4 + $0xe] sm:$0xff]
          %v450 = vstv %s447
          %v451 = vmul.f32 %v450, %v448
          %v452 = vmul.f32 %v450, %v449
          %v453 = vadd.f32 %v421, %v451
          %v454 = vadd.f32 %v422, %v452
          %s455 = sld [smem:[#allocation5 + $0x1]]
          %v456 = vld [vmem:[%s287] sm:$0xff]
          %v457 = vld [vmem:[%s287 + $0x8] sm:$0xff]
          %v458 = vstv %s455
          %v459 = vmul.f32 %v458, %v456
          %v460 = vmul.f32 %v458, %v457
          %v461 = vadd.f32 %v429, %v459
          %v462 = vadd.f32 %v430, %v460
          %s463 = sld [smem:[#allocation5 + $0x8]]
          %v464 = vld [vmem:[%s287 + $0x1] sm:$0xff]
          %v465 = vld [vmem:[%s287 + $0x9] sm:$0xff]
          %v466 = vstv %s463
          %v467 = vmul.f32 %v466, %v464
          %v468 = vmul.f32 %v466, %v465
          %v469 = vadd.f32 %v437, %v467
          %v470 = vadd.f32 %v438, %v468
          %s471 = sld [smem:[#allocation5 + $0xf]]
          %v472 = vld [vmem:[%s287 + $0x2] sm:$0xff]
          %v473 = vld [vmem:[%s287 + $0xa] sm:$0xff]
          %v474 = vstv %s471
          %v475 = vmul.f32 %v474, %v472
          %v476 = vmul.f32 %v474, %v473
          %v477 = vadd.f32 %v445, %v475
          %v478 = vadd.f32 %v446, %v476
          %s479 = sld [smem:[#allocation5 + $0x16]]
          %v480 = vld [vmem:[%s287 + $0x3] sm:$0xff]
          %v481 = vld [vmem:[%s287 + $0xb] sm:$0xff]
          %v482 = vstv %s479
          %v483 = vmul.f32 %v482, %v480
          %v484 = vmul.f32 %v482, %v481
          %v485 = vadd.f32 %v453, %v483
          %v486 = vadd.f32 %v454, %v484
          %s487 = sld [smem:[#allocation5 + $0x1d]]
          %v488 = vld [vmem:[%s287 + $0x4] sm:$0xff]
          %v489 = vld [vmem:[%s287 + $0xc] sm:$0xff]
          %v490 = vstv %s487
          %v491 = vmul.f32 %v490, %v488
          %v492 = vmul.f32 %v490, %v489
          %v493 = vadd.f32 %v461, %v491
          %v494 = vadd.f32 %v462, %v492
          %s495 = sld [smem:[#allocation5 + $0x24]]
          %v496 = vld [vmem:[%s287 + $0x5] sm:$0xff]
          %v497 = vld [vmem:[%s287 + $0xd] sm:$0xff]
          %v498 = vstv %s495
          %v499 = vmul.f32 %v498, %v496
          %v500 = vmul.f32 %v498, %v497
          %v501 = vadd.f32 %v469, %v499
          %v502 = vadd.f32 %v470, %v500
          %s503 = sld [smem:[#allocation5 + $0x2b]]
          %v504 = vld [vmem:[%s287 + $0x6] sm:$0xff]
          %v505 = vld [vmem:[%s287 + $0xe] sm:$0xff]
          %v506 = vstv %s503
          %v507 = vmul.f32 %v506, %v504
          %v508 = vmul.f32 %v506, %v505
          %v509 = vadd.f32 %v477, %v507
          %v510 = vadd.f32 %v478, %v508
          %s511 = sld [smem:[#allocation5 + $0x2]]
          %v512 = vld [vmem:[%s297] sm:$0xff]
          %v513 = vld [vmem:[%s297 + $0x8] sm:$0xff]
          %v514 = vstv %s511
          %v515 = vmul.f32 %v514, %v512
          %v516 = vmul.f32 %v514, %v513
          %v517 = vadd.f32 %v485, %v515
          %v518 = vadd.f32 %v486, %v516
          %s519 = sld [smem:[#allocation5 + $0x9]]
          %v520 = vld [vmem:[%s297 + $0x1] sm:$0xff]
          %v521 = vld [vmem:[%s297 + $0x9] sm:$0xff]
          %v522 = vstv %s519
          %v523 = vmul.f32 %v522, %v520
          %v524 = vmul.f32 %v522, %v521
          %v525 = vadd.f32 %v493, %v523
          %v526 = vadd.f32 %v494, %v524
          %s527 = sld [smem:[#allocation5 + $0x10]]
          %v528 = vld [vmem:[%s297 + $0x2] sm:$0xff]
          %v529 = vld [vmem:[%s297 + $0xa] sm:$0xff]
          %v530 = vstv %s527
          %v531 = vmul.f32 %v530, %v528
          %v532 = vmul.f32 %v530, %v529
          %v533 = vadd.f32 %v501, %v531
          %v534 = vadd.f32 %v502, %v532
          %s535 = sld [smem:[#allocation5 + $0x17]]
          %v536 = vld [vmem:[%s297 + $0x3] sm:$0xff]
          %v537 = vld [vmem:[%s297 + $0xb] sm:$0xff]
          %v538 = vstv %s535
          %v539 = vmul.f32 %v538, %v536
          %v540 = vmul.f32 %v538, %v537
          %v541 = vadd.f32 %v509, %v539
          %v542 = vadd.f32 %v510, %v540
          %s543 = sld [smem:[#allocation5 + $0x1e]]
          %v544 = vld [vmem:[%s297 + $0x4] sm:$0xff]
          %v545 = vld [vmem:[%s297 + $0xc] sm:$0xff]
          %v546 = vstv %s543
          %v547 = vmul.f32 %v546, %v544
          %v548 = vmul.f32 %v546, %v545
          %v549 = vadd.f32 %v517, %v547
          %v550 = vadd.f32 %v518, %v548
          %s551 = sld [smem:[#allocation5 + $0x25]]
          %v552 = vld [vmem:[%s297 + $0x5] sm:$0xff]
          %v553 = vld [vmem:[%s297 + $0xd] sm:$0xff]
          %v554 = vstv %s551
          %v555 = vmul.f32 %v554, %v552
          %v556 = vmul.f32 %v554, %v553
          %v557 = vadd.f32 %v525, %v555
          %v558 = vadd.f32 %v526, %v556
          %s559 = sld [smem:[#allocation5 + $0x2c]]
          %v560 = vld [vmem:[%s297 + $0x6] sm:$0xff]
          %v561 = vld [vmem:[%s297 + $0xe] sm:$0xff]
          %v562 = vstv %s559
          %v563 = vmul.f32 %v562, %v560
          %v564 = vmul.f32 %v562, %v561
          %v565 = vadd.f32 %v533, %v563
          %v566 = vadd.f32 %v534, %v564
          %s567 = sld [smem:[#allocation5 + $0x3]]
          %v568 = vld [vmem:[%s301] sm:$0xff]
          %v569 = vld [vmem:[%s301 + $0x8] sm:$0xff]
          %v570 = vstv %s567
          %v571 = vmul.f32 %v570, %v568
          %v572 = vmul.f32 %v570, %v569
          %v573 = vadd.f32 %v541, %v571
          %v574 = vadd.f32 %v542, %v572
          %s575 = sld [smem:[#allocation5 + $0xa]]
          %v576 = vld [vmem:[%s301 + $0x1] sm:$0xff]
          %v577 = vld [vmem:[%s301 + $0x9] sm:$0xff]
          %v578 = vstv %s575
          %v579 = vmul.f32 %v578, %v576
          %v580 = vmul.f32 %v578, %v577
          %v581 = vadd.f32 %v549, %v579
          %v582 = vadd.f32 %v550, %v580
          %s583 = sld [smem:[#allocation5 + $0x11]]
          %v584 = vld [vmem:[%s301 + $0x2] sm:$0xff]
          %v585 = vld [vmem:[%s301 + $0xa] sm:$0xff]
          %v586 = vstv %s583
          %v587 = vmul.f32 %v586, %v584
          %v588 = vmul.f32 %v586, %v585
          %v589 = vadd.f32 %v557, %v587
          %v590 = vadd.f32 %v558, %v588
          %s591 = sld [smem:[#allocation5 + $0x18]]
          %v592 = vld [vmem:[%s301 + $0x3] sm:$0xff]
          %v593 = vld [vmem:[%s301 + $0xb] sm:$0xff]
          %v594 = vstv %s591
          %v595 = vmul.f32 %v594, %v592
          %v596 = vmul.f32 %v594, %v593
          %v597 = vadd.f32 %v565, %v595
          %v598 = vadd.f32 %v566, %v596
          %s599 = sld [smem:[#allocation5 + $0x1f]]
          %v600 = vld [vmem:[%s301 + $0x4] sm:$0xff]
          %v601 = vld [vmem:[%s301 + $0xc] sm:$0xff]
          %v602 = vstv %s599
          %v603 = vmul.f32 %v602, %v600
          %v604 = vmul.f32 %v602, %v601
          %v605 = vadd.f32 %v573, %v603
          %v606 = vadd.f32 %v574, %v604
          %s607 = sld [smem:[#allocation5 + $0x26]]
          %v608 = vld [vmem:[%s301 + $0x5] sm:$0xff]
          %v609 = vld [vmem:[%s301 + $0xd] sm:$0xff]
          %v610 = vstv %s607
          %v611 = vmul.f32 %v610, %v608
          %v612 = vmul.f32 %v610, %v609
          %v613 = vadd.f32 %v581, %v611
          %v614 = vadd.f32 %v582, %v612
          %s615 = sld [smem:[#allocation5 + $0x2d]]
          %v616 = vld [vmem:[%s301 + $0x6] sm:$0xff]
          %v617 = vld [vmem:[%s301 + $0xe] sm:$0xff]
          %v618 = vstv %s615
          %v619 = vmul.f32 %v618, %v616
          %v620 = vmul.f32 %v618, %v617
          %v621 = vadd.f32 %v589, %v619
          %v622 = vadd.f32 %v590, %v620
          %s623 = sld [smem:[#allocation5 + $0x4]]
          %v624 = vld [vmem:[%s311] sm:$0xff]
          %v625 = vld [vmem:[%s311 + $0x8] sm:$0xff]
          %v626 = vstv %s623
          %v627 = vmul.f32 %v626, %v624
          %v628 = vmul.f32 %v626, %v625
          %v629 = vadd.f32 %v597, %v627
          %v630 = vadd.f32 %v598, %v628
          %s631 = sld [smem:[#allocation5 + $0xb]]
          %v632 = vld [vmem:[%s311 + $0x1] sm:$0xff]
          %v633 = vld [vmem:[%s311 + $0x9] sm:$0xff]
          %v634 = vstv %s631
          %v635 = vmul.f32 %v634, %v632
          %v636 = vmul.f32 %v634, %v633
          %v637 = vadd.f32 %v605, %v635
          %v638 = vadd.f32 %v606, %v636
          %s639 = sld [smem:[#allocation5 + $0x12]]
          %v640 = vld [vmem:[%s311 + $0x2] sm:$0xff]
          %v641 = vld [vmem:[%s311 + $0xa] sm:$0xff]
          %v642 = vstv %s639
          %v643 = vmul.f32 %v642, %v640
          %v644 = vmul.f32 %v642, %v641
          %v645 = vadd.f32 %v613, %v643
          %v646 = vadd.f32 %v614, %v644
          %s647 = sld [smem:[#allocation5 + $0x19]]
          %v648 = vld [vmem:[%s311 + $0x3] sm:$0xff]
          %v649 = vld [vmem:[%s311 + $0xb] sm:$0xff]
          %v650 = vstv %s647
          %v651 = vmul.f32 %v650, %v648
          %v652 = vmul.f32 %v650, %v649
          %v653 = vadd.f32 %v621, %v651
          %v654 = vadd.f32 %v622, %v652
          %s655 = sld [smem:[#allocation5 + $0x20]]
          %v656 = vld [vmem:[%s311 + $0x4] sm:$0xff]
          %v657 = vld [vmem:[%s311 + $0xc] sm:$0xff]
          %v658 = vstv %s655
          %v659 = vmul.f32 %v658, %v656
          %v660 = vmul.f32 %v658, %v657
          %v661 = vadd.f32 %v629, %v659
          %v662 = vadd.f32 %v630, %v660
          %s663 = sld [smem:[#allocation5 + $0x27]]
          %v664 = vld [vmem:[%s311 + $0x5] sm:$0xff]
          %v665 = vld [vmem:[%s311 + $0xd] sm:$0xff]
          %v666 = vstv %s663
          %v667 = vmul.f32 %v666, %v664
          %v668 = vmul.f32 %v666, %v665
          %v669 = vadd.f32 %v637, %v667
          %v670 = vadd.f32 %v638, %v668
          %s671 = sld [smem:[#allocation5 + $0x2e]]
          %v672 = vld [vmem:[%s311 + $0x6] sm:$0xff]
          %v673 = vld [vmem:[%s311 + $0xe] sm:$0xff]
          %v674 = vstv %s671
          %v675 = vmul.f32 %v674, %v672
          %v676 = vmul.f32 %v674, %v673
          %v677 = vadd.f32 %v645, %v675
          %v678 = vadd.f32 %v646, %v676
          %s679 = sld [smem:[#allocation5 + $0x5]]
          %v680 = vld [vmem:[%s321] sm:$0xff]
          %v681 = vld [vmem:[%s321 + $0x8] sm:$0xff]
          %v682 = vstv %s679
          %v683 = vmul.f32 %v682, %v680
          %v684 = vmul.f32 %v682, %v681
          %v685 = vadd.f32 %v653, %v683
          %v686 = vadd.f32 %v654, %v684
          %s687 = sld [smem:[#allocation5 + $0xc]]
          %v688 = vld [vmem:[%s321 + $0x1] sm:$0xff]
          %v689 = vld [vmem:[%s321 + $0x9] sm:$0xff]
          %v690 = vstv %s687
          %v691 = vmul.f32 %v690, %v688
          %v692 = vmul.f32 %v690, %v689
          %v693 = vadd.f32 %v661, %v691
          %v694 = vadd.f32 %v662, %v692
          %s695 = sld [smem:[#allocation5 + $0x13]]
          %v696 = vld [vmem:[%s321 + $0x2] sm:$0xff]
          %v697 = vld [vmem:[%s321 + $0xa] sm:$0xff]
          %v698 = vstv %s695
          %v699 = vmul.f32 %v698, %v696
          %v700 = vmul.f32 %v698, %v697
          %v701 = vadd.f32 %v669, %v699
          %v702 = vadd.f32 %v670, %v700
          %s703 = sld [smem:[#allocation5 + $0x1a]]
          %v704 = vld [vmem:[%s321 + $0x3] sm:$0xff]
          %v705 = vld [vmem:[%s321 + $0xb] sm:$0xff]
          %v706 = vstv %s703
          %v707 = vmul.f32 %v706, %v704
          %v708 = vmul.f32 %v706, %v705
          %v709 = vadd.f32 %v677, %v707
          %v710 = vadd.f32 %v678, %v708
          %s711 = sld [smem:[#allocation5 + $0x21]]
          %v712 = vld [vmem:[%s321 + $0x4] sm:$0xff]
          %v713 = vld [vmem:[%s321 + $0xc] sm:$0xff]
          %v714 = vstv %s711
          %v715 = vmul.f32 %v714, %v712
          %v716 = vmul.f32 %v714, %v713
          %v717 = vadd.f32 %v685, %v715
          %v718 = vadd.f32 %v686, %v716
          %s719 = sld [smem:[#allocation5 + $0x28]]
          %v720 = vld [vmem:[%s321 + $0x5] sm:$0xff]
          %v721 = vld [vmem:[%s321 + $0xd] sm:$0xff]
          %v722 = vstv %s719
          %v723 = vmul.f32 %v722, %v720
          %v724 = vmul.f32 %v722, %v721
          %v725 = vadd.f32 %v693, %v723
          %v726 = vadd.f32 %v694, %v724
          %s727 = sld [smem:[#allocation5 + $0x2f]]
          %v728 = vld [vmem:[%s321 + $0x6] sm:$0xff]
          %v729 = vld [vmem:[%s321 + $0xe] sm:$0xff]
          %v730 = vstv %s727
          %v731 = vmul.f32 %v730, %v728
          %v732 = vmul.f32 %v730, %v729
          %v733 = vadd.f32 %v701, %v731
          %v734 = vadd.f32 %v702, %v732
          %s735 = sld [smem:[#allocation5 + $0x6]]
          %v736 = vld [vmem:[%s331] sm:$0xff]
          %v737 = vld [vmem:[%s331 + $0x8] sm:$0xff]
          %v738 = vstv %s735
          %v739 = vmul.f32 %v738, %v736
          %v740 = vmul.f32 %v738, %v737
          %v741 = vadd.f32 %v709, %v739
          %v742 = vadd.f32 %v710, %v740
          %s743 = sld [smem:[#allocation5 + $0xd]]
          %v744 = vld [vmem:[%s331 + $0x1] sm:$0xff]
          %v745 = vld [vmem:[%s331 + $0x9] sm:$0xff]
          %v746 = vstv %s743
          %v747 = vmul.f32 %v746, %v744
          %v748 = vmul.f32 %v746, %v745
          %v749 = vadd.f32 %v717, %v747
          %v750 = vadd.f32 %v718, %v748
          %s751 = sld [smem:[#allocation5 + $0x14]]
          %v752 = vld [vmem:[%s331 + $0x2] sm:$0xff]
          %v753 = vld [vmem:[%s331 + $0xa] sm:$0xff]
          %v754 = vstv %s751
          %v755 = vmul.f32 %v754, %v752
          %v756 = vmul.f32 %v754, %v753
          %v757 = vadd.f32 %v725, %v755
          %v758 = vadd.f32 %v726, %v756
          %s759 = sld [smem:[#allocation5 + $0x1b]]
          %v760 = vld [vmem:[%s331 + $0x3] sm:$0xff]
          %v761 = vld [vmem:[%s331 + $0xb] sm:$0xff]
          %v762 = vstv %s759
          %v763 = vmul.f32 %v762, %v760
          %v764 = vmul.f32 %v762, %v761
          %v765 = vadd.f32 %v733, %v763
          %v766 = vadd.f32 %v734, %v764
          %s767 = sld [smem:[#allocation5 + $0x22]]
          %v768 = vld [vmem:[%s331 + $0x4] sm:$0xff]
          %v769 = vld [vmem:[%s331 + $0xc] sm:$0xff]
          %v770 = vstv %s767
          %v771 = vmul.f32 %v770, %v768
          %v772 = vmul.f32 %v770, %v769
          %v773 = vadd.f32 %v741, %v771
          %v774 = vadd.f32 %v742, %v772
          %s775 = sld [smem:[#allocation5 + $0x29]]
          %v776 = vld [vmem:[%s331 + $0x5] sm:$0xff]
          %v777 = vld [vmem:[%s331 + $0xd] sm:$0xff]
          %v778 = vstv %s775
          %v779 = vmul.f32 %v778, %v776
          %v780 = vmul.f32 %v778, %v777
          %v781 = vadd.f32 %v749, %v779
          %v782 = vadd.f32 %v750, %v780
          %s783 = sld [smem:[#allocation5 + $0x30]]
          %v784 = vld [vmem:[%s331 + $0x6] sm:$0xff]
          %v785 = vld [vmem:[%s331 + $0xe] sm:$0xff]
          %v786 = vstv %s783
          %v787 = vmul.f32 %v786, %v784
          %v788 = vmul.f32 %v786, %v785
          %v789 = vadd.f32 %v757, %v787
          %v790 = vadd.f32 %v758, %v788
          %s791 = sld [smem:[#allocation5 + $0x31]]
          %v792 = vld [vmem:[%s341] sm:$0xff]
          %v793 = vld [vmem:[%s341 + $0x8] sm:$0xff]
          %v794 = vstv %s791
          %v795 = vmul.f32 %v794, %v792
          %v796 = vmul.f32 %v794, %v793
          %v797 = vadd.f32 %v765, %v795
          %v798 = vadd.f32 %v766, %v796
          %s799 = sld [smem:[#allocation5 + $0x38]]
          %v800 = vld [vmem:[%s341 + $0x1] sm:$0xff]
          %v801 = vld [vmem:[%s341 + $0x9] sm:$0xff]
          %v802 = vstv %s799
          %v803 = vmul.f32 %v802, %v800
          %v804 = vmul.f32 %v802, %v801
          %v805 = vadd.f32 %v773, %v803
          %v806 = vadd.f32 %v774, %v804
          %s807 = sld [smem:[#allocation5 + $0x3f]]
          %v808 = vld [vmem:[%s341 + $0x2] sm:$0xff]
          %v809 = vld [vmem:[%s341 + $0xa] sm:$0xff]
          %v810 = vstv %s807
          %v811 = vmul.f32 %v810, %v808
          %v812 = vmul.f32 %v810, %v809
          %v813 = vadd.f32 %v781, %v811
          %v814 = vadd.f32 %v782, %v812
          %s815 = sld [smem:[#allocation5 + $0x46]]
          %v816 = vld [vmem:[%s341 + $0x3] sm:$0xff]
          %v817 = vld [vmem:[%s341 + $0xb] sm:$0xff]
          %v818 = vstv %s815
          %v819 = vmul.f32 %v818, %v816
          %v820 = vmul.f32 %v818, %v817
          %v821 = vadd.f32 %v789, %v819
          %v822 = vadd.f32 %v790, %v820
          %s823 = sld [smem:[#allocation5 + $0x4d]]
          %v824 = vld [vmem:[%s341 + $0x4] sm:$0xff]
          %v825 = vld [vmem:[%s341 + $0xc] sm:$0xff]
          %v826 = vstv %s823
          %v827 = vmul.f32 %v826, %v824
          %v828 = vmul.f32 %v826, %v825
          %v829 = vadd.f32 %v797, %v827
          %v830 = vadd.f32 %v798, %v828
          %s831 = sld [smem:[#allocation5 + $0x54]]
          %v832 = vld [vmem:[%s341 + $0x5] sm:$0xff]
          %v833 = vld [vmem:[%s341 + $0xd] sm:$0xff]
          %v834 = vstv %s831
          %v835 = vmul.f32 %v834, %v832
          %v836 = vmul.f32 %v834, %v833
          %v837 = vadd.f32 %v805, %v835
          %v838 = vadd.f32 %v806, %v836
          %s839 = sld [smem:[#allocation5 + $0x5b]]
          %v840 = vld [vmem:[%s341 + $0x6] sm:$0xff]
          %v841 = vld [vmem:[%s341 + $0xe] sm:$0xff]
          %v842 = vstv %s839
          %v843 = vmul.f32 %v842, %v840
          %v844 = vmul.f32 %v842, %v841
          %v845 = vadd.f32 %v813, %v843
          %v846 = vadd.f32 %v814, %v844
          %s847 = sld [smem:[#allocation5 + $0x32]]
          %v848 = vld [vmem:[%s351] sm:$0xff]
          %v849 = vld [vmem:[%s351 + $0x8] sm:$0xff]
          %v850 = vstv %s847
          %v851 = vmul.f32 %v850, %v848
          %v852 = vmul.f32 %v850, %v849
          %v853 = vadd.f32 %v821, %v851
          %v854 = vadd.f32 %v822, %v852
          %s855 = sld [smem:[#allocation5 + $0x39]]
          %v856 = vld [vmem:[%s351 + $0x1] sm:$0xff]
          %v857 = vld [vmem:[%s351 + $0x9] sm:$0xff]
          %v858 = vstv %s855
          %v859 = vmul.f32 %v858, %v856
          %v860 = vmul.f32 %v858, %v857
          %v861 = vadd.f32 %v829, %v859
          %v862 = vadd.f32 %v830, %v860
          %s863 = sld [smem:[#allocation5 + $0x40]]
          %v864 = vld [vmem:[%s351 + $0x2] sm:$0xff]
          %v865 = vld [vmem:[%s351 + $0xa] sm:$0xff]
          %v866 = vstv %s863
          %v867 = vmul.f32 %v866, %v864
          %v868 = vmul.f32 %v866, %v865
          %v869 = vadd.f32 %v837, %v867
          %v870 = vadd.f32 %v838, %v868
          %s871 = sld [smem:[#allocation5 + $0x47]]
          %v872 = vld [vmem:[%s351 + $0x3] sm:$0xff]
          %v873 = vld [vmem:[%s351 + $0xb] sm:$0xff]
          %v874 = vstv %s871
          %v875 = vmul.f32 %v874, %v872
          %v876 = vmul.f32 %v874, %v873
          %v877 = vadd.f32 %v845, %v875
          %v878 = vadd.f32 %v846, %v876
          %s879 = sld [smem:[#allocation5 + $0x4e]]
          %v880 = vld [vmem:[%s351 + $0x4] sm:$0xff]
          %v881 = vld [vmem:[%s351 + $0xc] sm:$0xff]
          %v882 = vstv %s879
          %v883 = vmul.f32 %v882, %v880
          %v884 = vmul.f32 %v882, %v881
          %v885 = vadd.f32 %v853, %v883
          %v886 = vadd.f32 %v854, %v884
          %s887 = sld [smem:[#allocation5 + $0x55]]
          %v888 = vld [vmem:[%s351 + $0x5] sm:$0xff]
          %v889 = vld [vmem:[%s351 + $0xd] sm:$0xff]
          %v890 = vstv %s887
          %v891 = vmul.f32 %v890, %v888
          %v892 = vmul.f32 %v890, %v889
          %v893 = vadd.f32 %v861, %v891
          %v894 = vadd.f32 %v862, %v892
          %s895 = sld [smem:[#allocation5 + $0x5c]]
          %v896 = vld [vmem:[%s351 + $0x6] sm:$0xff]
          %v897 = vld [vmem:[%s351 + $0xe] sm:$0xff]
          %v898 = vstv %s895
          %v899 = vmul.f32 %v898, %v896
          %v900 = vmul.f32 %v898, %v897
          %v901 = vadd.f32 %v869, %v899
          %v902 = vadd.f32 %v870, %v900
          %s903 = sld [smem:[#allocation5 + $0x33]]
          %v904 = vld [vmem:[%s361] sm:$0xff]
          %v905 = vld [vmem:[%s361 + $0x8] sm:$0xff]
          %v906 = vstv %s903
          %v907 = vmul.f32 %v906, %v904
          %v908 = vmul.f32 %v906, %v905
          %v909 = vadd.f32 %v877, %v907
          %v910 = vadd.f32 %v878, %v908
          %s911 = sld [smem:[#allocation5 + $0x3a]]
          %v912 = vld [vmem:[%s361 + $0x1] sm:$0xff]
          %v913 = vld [vmem:[%s361 + $0x9] sm:$0xff]
          %v914 = vstv %s911
          %v915 = vmul.f32 %v914, %v912
          %v916 = vmul.f32 %v914, %v913
          %v917 = vadd.f32 %v885, %v915
          %v918 = vadd.f32 %v886, %v916
          %s919 = sld [smem:[#allocation5 + $0x41]]
          %v920 = vld [vmem:[%s361 + $0x2] sm:$0xff]
          %v921 = vld [vmem:[%s361 + $0xa] sm:$0xff]
          %v922 = vstv %s919
          %v923 = vmul.f32 %v922, %v920
          %v924 = vmul.f32 %v922, %v921
          %v925 = vadd.f32 %v893, %v923
          %v926 = vadd.f32 %v894, %v924
          %s927 = sld [smem:[#allocation5 + $0x48]]
          %v928 = vld [vmem:[%s361 + $0x3] sm:$0xff]
          %v929 = vld [vmem:[%s361 + $0xb] sm:$0xff]
          %v930 = vstv %s927
          %v931 = vmul.f32 %v930, %v928
          %v932 = vmul.f32 %v930, %v929
          %v933 = vadd.f32 %v901, %v931
          %v934 = vadd.f32 %v902, %v932
          %s935 = sld [smem:[#allocation5 + $0x4f]]
          %v936 = vld [vmem:[%s361 + $0x4] sm:$0xff]
          %v937 = vld [vmem:[%s361 + $0xc] sm:$0xff]
          %v938 = vstv %s935
          %v939 = vmul.f32 %v938, %v936
          %v940 = vmul.f32 %v938, %v937
          %v941 = vadd.f32 %v909, %v939
          %v942 = vadd.f32 %v910, %v940
          %s943 = sld [smem:[#allocation5 + $0x56]]
          %v944 = vld [vmem:[%s361 + $0x5] sm:$0xff]
          %v945 = vld [vmem:[%s361 + $0xd] sm:$0xff]
          %v946 = vstv %s943
          %v947 = vmul.f32 %v946, %v944
          %v948 = vmul.f32 %v946, %v945
          %v949 = vadd.f32 %v917, %v947
          %v950 = vadd.f32 %v918, %v948
          %s951 = sld [smem:[#allocation5 + $0x5d]]
          %v952 = vld [vmem:[%s361 + $0x6] sm:$0xff]
          %v953 = vld [vmem:[%s361 + $0xe] sm:$0xff]
          %v954 = vstv %s951
          %v955 = vmul.f32 %v954, %v952
          %v956 = vmul.f32 %v954, %v953
          %v957 = vadd.f32 %v925, %v955
          %v958 = vadd.f32 %v926, %v956
          %s959 = sld [smem:[#allocation5 + $0x34]]
          %v960 = vld [vmem:[%s365] sm:$0xff]
          %v961 = vld [vmem:[%s365 + $0x8] sm:$0xff]
          %v962 = vstv %s959
          %v963 = vmul.f32 %v962, %v960
          %v964 = vmul.f32 %v962, %v961
          %v965 = vadd.f32 %v933, %v963
          %v966 = vadd.f32 %v934, %v964
          %s967 = sld [smem:[#allocation5 + $0x3b]]
          %v968 = vld [vmem:[%s365 + $0x1] sm:$0xff]
          %v969 = vld [vmem:[%s365 + $0x9] sm:$0xff]
          %v970 = vstv %s967
          %v971 = vmul.f32 %v970, %v968
          %v972 = vmul.f32 %v970, %v969
          %v973 = vadd.f32 %v941, %v971
          %v974 = vadd.f32 %v942, %v972
          %s975 = sld [smem:[#allocation5 + $0x42]]
          %v976 = vld [vmem:[%s365 + $0x2] sm:$0xff]
          %v977 = vld [vmem:[%s365 + $0xa] sm:$0xff]
          %v978 = vstv %s975
          %v979 = vmul.f32 %v978, %v976
          %v980 = vmul.f32 %v978, %v977
          %v981 = vadd.f32 %v949, %v979
          %v982 = vadd.f32 %v950, %v980
          %s983 = sld [smem:[#allocation5 + $0x49]]
          %v984 = vld [vmem:[%s365 + $0x3] sm:$0xff]
          %v985 = vld [vmem:[%s365 + $0xb] sm:$0xff]
          %v986 = vstv %s983
          %v987 = vmul.f32 %v986, %v984
          %v988 = vmul.f32 %v986, %v985
          %v989 = vadd.f32 %v957, %v987
          %v990 = vadd.f32 %v958, %v988
          %s991 = sld [smem:[#allocation5 + $0x50]]
          %v992 = vld [vmem:[%s365 + $0x4] sm:$0xff]
          %v993 = vld [vmem:[%s365 + $0xc] sm:$0xff]
          %v994 = vstv %s991
          %v995 = vmul.f32 %v994, %v992
          %v996 = vmul.f32 %v994, %v993
          %v997 = vadd.f32 %v965, %v995
          %v998 = vadd.f32 %v966, %v996
          %s999 = sld [smem:[#allocation5 + $0x57]]
          %v1000 = vld [vmem:[%s365 + $0x5] sm:$0xff]
          %v1001 = vld [vmem:[%s365 + $0xd] sm:$0xff]
          %v1002 = vstv %s999
          %v1003 = vmul.f32 %v1002, %v1000
          %v1004 = vmul.f32 %v1002, %v1001
          %v1005 = vadd.f32 %v973, %v1003
          %v1006 = vadd.f32 %v974, %v1004
          %s1007 = sld [smem:[#allocation5 + $0x5e]]
          %v1008 = vld [vmem:[%s365 + $0x6] sm:$0xff]
          %v1009 = vld [vmem:[%s365 + $0xe] sm:$0xff]
          %v1010 = vstv %s1007
          %v1011 = vmul.f32 %v1010, %v1008
          %v1012 = vmul.f32 %v1010, %v1009
          %v1013 = vadd.f32 %v981, %v1011
          %v1014 = vadd.f32 %v982, %v1012
          %s1015 = sld [smem:[#allocation5 + $0x35]]
          %v1016 = vld [vmem:[%s375] sm:$0xff]
          %v1017 = vld [vmem:[%s375 + $0x8] sm:$0xff]
          %v1018 = vstv %s1015
          %v1019 = vmul.f32 %v1018, %v1016
          %v1020 = vmul.f32 %v1018, %v1017
          %v1021 = vadd.f32 %v989, %v1019
          %v1022 = vadd.f32 %v990, %v1020
          %s1023 = sld [smem:[#allocation5 + $0x3c]]
          %v1024 = vld [vmem:[%s375 + $0x1] sm:$0xff]
          %v1025 = vld [vmem:[%s375 + $0x9] sm:$0xff]
          %v1026 = vstv %s1023
          %v1027 = vmul.f32 %v1026, %v1024
          %v1028 = vmul.f32 %v1026, %v1025
          %v1029 = vadd.f32 %v997, %v1027
          %v1030 = vadd.f32 %v998, %v1028
          %s1031 = sld [smem:[#allocation5 + $0x43]]
          %v1032 = vld [vmem:[%s375 + $0x2] sm:$0xff]
          %v1033 = vld [vmem:[%s375 + $0xa] sm:$0xff]
          %v1034 = vstv %s1031
          %v1035 = vmul.f32 %v1034, %v1032
          %v1036 = vmul.f32 %v1034, %v1033
          %v1037 = vadd.f32 %v1005, %v1035
          %v1038 = vadd.f32 %v1006, %v1036
          %s1039 = sld [smem:[#allocation5 + $0x4a]]
          %v1040 = vld [vmem:[%s375 + $0x3] sm:$0xff]
          %v1041 = vld [vmem:[%s375 + $0xb] sm:$0xff]
          %v1042 = vstv %s1039
          %v1043 = vmul.f32 %v1042, %v1040
          %v1044 = vmul.f32 %v1042, %v1041
          %v1045 = vadd.f32 %v1013, %v1043
          %v1046 = vadd.f32 %v1014, %v1044
          %s1047 = sld [smem:[#allocation5 + $0x51]]
          %v1048 = vld [vmem:[%s375 + $0x4] sm:$0xff]
          %v1049 = vld [vmem:[%s375 + $0xc] sm:$0xff]
          %v1050 = vstv %s1047
          %v1051 = vmul.f32 %v1050, %v1048
          %v1052 = vmul.f32 %v1050, %v1049
          %v1053 = vadd.f32 %v1021, %v1051
          %v1054 = vadd.f32 %v1022, %v1052
          %s1055 = sld [smem:[#allocation5 + $0x58]]
          %v1056 = vld [vmem:[%s375 + $0x5] sm:$0xff]
          %v1057 = vld [vmem:[%s375 + $0xd] sm:$0xff]
          %v1058 = vstv %s1055
          %v1059 = vmul.f32 %v1058, %v1056
          %v1060 = vmul.f32 %v1058, %v1057
          %v1061 = vadd.f32 %v1029, %v1059
          %v1062 = vadd.f32 %v1030, %v1060
          %s1063 = sld [smem:[#allocation5 + $0x5f]]
          %v1064 = vld [vmem:[%s375 + $0x6] sm:$0xff]
          %v1065 = vld [vmem:[%s375 + $0xe] sm:$0xff]
          %v1066 = vstv %s1063
          %v1067 = vmul.f32 %v1066, %v1064
          %v1068 = vmul.f32 %v1066, %v1065
          %v1069 = vadd.f32 %v1037, %v1067
          %v1070 = vadd.f32 %v1038, %v1068
          %s1071 = sld [smem:[#allocation5 + $0x36]]
          %v1072 = vld [vmem:[%s385] sm:$0xff]
          %v1073 = vld [vmem:[%s385 + $0x8] sm:$0xff]
          %v1074 = vstv %s1071
          %v1075 = vmul.f32 %v1074, %v1072
          %v1076 = vmul.f32 %v1074, %v1073
          %v1077 = vadd.f32 %v1045, %v1075
          %v1078 = vadd.f32 %v1046, %v1076
          %s1079 = sld [smem:[#allocation5 + $0x3d]]
          %v1080 = vld [vmem:[%s385 + $0x1] sm:$0xff]
          %v1081 = vld [vmem:[%s385 + $0x9] sm:$0xff]
          %v1082 = vstv %s1079
          %v1083 = vmul.f32 %v1082, %v1080
          %v1084 = vmul.f32 %v1082, %v1081
          %v1085 = vadd.f32 %v1053, %v1083
          %v1086 = vadd.f32 %v1054, %v1084
          %s1087 = sld [smem:[#allocation5 + $0x44]]
          %v1088 = vld [vmem:[%s385 + $0x2] sm:$0xff]
          %v1089 = vld [vmem:[%s385 + $0xa] sm:$0xff]
          %v1090 = vstv %s1087
          %v1091 = vmul.f32 %v1090, %v1088
          %v1092 = vmul.f32 %v1090, %v1089
          %v1093 = vadd.f32 %v1061, %v1091
          %v1094 = vadd.f32 %v1062, %v1092
          %s1095 = sld [smem:[#allocation5 + $0x4b]]
          %v1096 = vld [vmem:[%s385 + $0x3] sm:$0xff]
          %v1097 = vld [vmem:[%s385 + $0xb] sm:$0xff]
          %v1098 = vstv %s1095
          %v1099 = vmul.f32 %v1098, %v1096
          %v1100 = vmul.f32 %v1098, %v1097
          %v1101 = vadd.f32 %v1069, %v1099
          %v1102 = vadd.f32 %v1070, %v1100
          %s1103 = sld [smem:[#allocation5 + $0x52]]
          %v1104 = vld [vmem:[%s385 + $0x4] sm:$0xff]
          %v1105 = vld [vmem:[%s385 + $0xc] sm:$0xff]
          %v1106 = vstv %s1103
          %v1107 = vmul.f32 %v1106, %v1104
          %v1108 = vmul.f32 %v1106, %v1105
          %v1109 = vadd.f32 %v1077, %v1107
          %v1110 = vadd.f32 %v1078, %v1108
          %s1111 = sld [smem:[#allocation5 + $0x59]]
          %v1112 = vld [vmem:[%s385 + $0x5] sm:$0xff]
          %v1113 = vld [vmem:[%s385 + $0xd] sm:$0xff]
          %v1114 = vstv %s1111
          %v1115 = vmul.f32 %v1114, %v1112
          %v1116 = vmul.f32 %v1114, %v1113
          %v1117 = vadd.f32 %v1085, %v1115
          %v1118 = vadd.f32 %v1086, %v1116
          %s1119 = sld [smem:[#allocation5 + $0x60]]
          %v1120 = vld [vmem:[%s385 + $0x6] sm:$0xff]
          %v1121 = vld [vmem:[%s385 + $0xe] sm:$0xff]
          %v1122 = vstv %s1119
          %v1123 = vmul.f32 %v1122, %v1120
          %v1124 = vmul.f32 %v1122, %v1121
          %v1125 = vadd.f32 %v1093, %v1123
          %v1126 = vadd.f32 %v1094, %v1124
          %s1127 = sld [smem:[#allocation5 + $0x37]]
          %v1128 = vld [vmem:[%s395] sm:$0xff]
          %v1129 = vld [vmem:[%s395 + $0x8] sm:$0xff]
          %v1130 = vstv %s1127
          %v1131 = vmul.f32 %v1130, %v1128
          %v1132 = vmul.f32 %v1130, %v1129
          %v1133 = vadd.f32 %v1101, %v1131
          %v1134 = vadd.f32 %v1102, %v1132
          %s1135 = sld [smem:[#allocation5 + $0x3e]]
          %v1136 = vld [vmem:[%s395 + $0x1] sm:$0xff]
          %v1137 = vld [vmem:[%s395 + $0x9] sm:$0xff]
          %v1138 = vstv %s1135
          %v1139 = vmul.f32 %v1138, %v1136
          %v1140 = vmul.f32 %v1138, %v1137
          %v1141 = vadd.f32 %v1109, %v1139
          %v1142 = vadd.f32 %v1110, %v1140
          %s1143 = sld [smem:[#allocation5 + $0x45]]
          %v1144 = vld [vmem:[%s395 + $0x2] sm:$0xff]
          %v1145 = vld [vmem:[%s395 + $0xa] sm:$0xff]
          %v1146 = vstv %s1143
          %v1147 = vmul.f32 %v1146, %v1144
          %v1148 = vmul.f32 %v1146, %v1145
          %v1149 = vadd.f32 %v1117, %v1147
          %v1150 = vadd.f32 %v1118, %v1148
          %s1151 = sld [smem:[#allocation5 + $0x4c]]
          %v1152 = vld [vmem:[%s395 + $0x3] sm:$0xff]
          %v1153 = vld [vmem:[%s395 + $0xb] sm:$0xff]
          %v1154 = vstv %s1151
          %v1155 = vmul.f32 %v1154, %v1152
          %v1156 = vmul.f32 %v1154, %v1153
          %v1157 = vadd.f32 %v1125, %v1155
          %v1158 = vadd.f32 %v1126, %v1156
          %s1159 = sld [smem:[#allocation5 + $0x53]]
          %v1160 = vld [vmem:[%s395 + $0x4] sm:$0xff]
          %v1161 = vld [vmem:[%s395 + $0xc] sm:$0xff]
          %v1162 = vstv %s1159
          %v1163 = vmul.f32 %v1162, %v1160
          %v1164 = vmul.f32 %v1162, %v1161
          %v1165 = vadd.f32 %v1133, %v1163
          %v1166 = vadd.f32 %v1134, %v1164
          %s1167 = sld [smem:[#allocation5 + $0x5a]]
          %v1168 = vld [vmem:[%s395 + $0x5] sm:$0xff]
          %v1169 = vld [vmem:[%s395 + $0xd] sm:$0xff]
          %v1170 = vstv %s1167
          %v1171 = vmul.f32 %v1170, %v1168
          %v1172 = vmul.f32 %v1170, %v1169
          %v1173 = vadd.f32 %v1141, %v1171
          %v1174 = vadd.f32 %v1142, %v1172
          %s1175 = sld [smem:[#allocation5 + $0x61]]
          %v1176 = vld [vmem:[%s395 + $0x6] sm:$0xff]
          %v1177 = vld [vmem:[%s395 + $0xe] sm:$0xff]
          %v1178 = vstv %s1175
          %v1179 = vmul.f32 %v1178, %v1176
          %v1180 = vmul.f32 %v1178, %v1177
          %v1181 = vadd.f32 %v1149, %v1179
          %v1182 = vadd.f32 %v1150, %v1180
          %v1183 = vadd.f32 %v1173, %v1181
          %v1184 = vadd.f32 %v1174, %v1182
          %v1185 = vadd.f32 %v1157, %v1165
          %v1186 = vadd.f32 %v1158, %v1166
          %v1187 = vadd.f32 %v1183, %v1185
          %v1188 = vadd.f32 %v1184, %v1186
          %v1189 = vxor.u32 %v1187, 2147483648
          %v1190 = vxor.u32 %v1188, 2147483648
          %v1191 = vmul.f32 %v1189, 1.442695
          %v1192 = vpow.pop %v1191
          %v1193 = vmul.f32 %v1190, 1.442695
          %v1194 = vpow.pop %v1193
          %v1195 = vadd.f32 %v1192, 1.0
          %v1196 = vadd.f32 %v1194, 1.0
          %v1197 = vrcp.pop %v1195
          %v1198 = vmul.f32 %v1195, %v1197
          %v1199 = vsub.f32 1.0, %v1198
          %v1200 = vmul.f32 %v1197, %v1199
          %v1201 = vadd.f32 %v1197, %v1200
          %vm1202 = vweird.f32 %v1195
          %vm1203 = vweird.f32 %v1197
          %vm1204 = vmor %vm1202, %vm1203
          %v1205 = vsel %vm1204, %v1197, %v1201
          %v1206 = vand.u32 2147483647, %v1195
          %vm1207 = vcmp.eq.f32.partialorder %v1206, 8.507059e+37
          %v1208 = vand.u32 %v1195, 2147483648
          %v1209 = vor.u32 1.1754944e-38, %v1208
          %v1210 = vsel %vm1207, %v1209, %v1205
          %v1211 = vmul.f32 1.0, %v1210
          %v1212 = vrcp.pop %v1196
          %v1213 = vmul.f32 %v1196, %v1212
          %v1214 = vsub.f32 1.0, %v1213
          %v1215 = vmul.f32 %v1212, %v1214
          %v1216 = vadd.f32 %v1212, %v1215
          %vm1217 = vweird.f32 %v1196
          %vm1218 = vweird.f32 %v1212
          %vm1219 = vmor %vm1217, %vm1218
          %v1220 = vsel %vm1219, %v1212, %v1216
          %v1221 = vand.u32 2147483647, %v1196
          %vm1222 = vcmp.eq.f32.partialorder %v1221, 8.507059e+37
          %v1223 = vand.u32 %v1196, 2147483648
          %v1224 = vor.u32 1.1754944e-38, %v1223
          %v1225 = vsel %vm1222, %v1224, %v1220
          %v1226 = vmul.f32 1.0, %v1225
          %1227 = vst [vmem:[%s194] sm:$0xff] %v1211
          %1228 = vst [vmem:[%s194 + $0x8] sm:$0xff] %v1226
        $region48: #{tpu_custom_call.1} parent=27 // pred_fallthru
          _
        %s1229 = sand.u32 %s89, 1
        %s1230 = scalar_lea.sflag [#allocation7], %s1229
        %s1231 = sand.u32 %s89, 1
        %s1232 = smul.addr %s1231, 16
        %s1233 = scalar_lea.vmem [#allocation10], %s1232
        // Predicated region
        $region49: #{tpu_custom_call.1} parent=27 // pred_check
          %p1234 = pneg %p99
        $region50: #{tpu_custom_call.1} parent=27 // pred_check_branch
          %1236 = sbr.rel (%p1234) target = $region52
        $region51: #{tpu_custom_call.1} parent=27 // pred_region
          %1238 = vsyncadd %s1230, 0
          %s1239 = smul.addr %s24, 2
          %s1240 = smul.addr %s1239, 8
          %s1241 = scalar_lea.hbm %s2, %s1240
          %s1242 = sshll.u32 %s1233, 4
          %s1243 = int_to_ptr.vmem [resolvable:$true] %s1242
          %s1244 = sshll.u32 %s1241, 4
          %s1245 = int_to_ptr.hbm [resolvable:$true] %s1244
          %1250 = dma.vmem_to_hbm [thread:$0]  %s1243, 256, %s1245, %s1230, 128, 128, 8
        $region52: #{tpu_custom_call.1} parent=27 // pred_fallthru
          _
      $region28: #{tpu_custom_call.1} parent=5 // pred_fallthru
        _
      %p1251 = scmp.le.s32.totalorder 2, %s15
      // Predicated region
      $region53: #{tpu_custom_call.1} parent=5 // pred_check
        %p1252 = pneg %p1251
      $region54: #{tpu_custom_call.1} parent=5 // pred_check_branch
        %1254 = sbr.rel (%p1252) target = $region56
      $region55: #{tpu_custom_call.1} parent=5 // pred_region
        %s1255 = ssub.s32 %s15, 2
        // Predicated region
        $region57: #{tpu_custom_call.1} parent=55 // pred_check
          %p1256 = pneg %p105
        $region58: #{tpu_custom_call.1} parent=55 // pred_check_branch
          %1258 = sbr.rel (%p1256) target = $region60
        $region59: #{tpu_custom_call.1} parent=55 // pred_region
          %s1259 = sand.u32 %s90, 1
          %s1260 = scalar_lea.sflag [#allocation7], %s1259
          %s1261 = sand.u32 %s90, 1
          %s1262 = smul.addr %s1261, 16
          %s1263 = scalar_lea.vmem [#allocation10], %s1262
          %1265 = dma.done %s1260, 256
        $region60: #{tpu_custom_call.1} parent=55 // pred_fallthru
          _
      $region56: #{tpu_custom_call.1} parent=5 // pred_fallthru
        _
    $region6: #{tpu_custom_call.1} parent=1 // loop_footer
      %s19 = sadd.s32 1, %s15
    $region7: #{tpu_custom_call.1} parent=1 // loop_footer_branch
      %14 = sbr.rel target = $region3
    $region8: #{tpu_custom_call.1} parent=1 // loop_exit
      _
    %1266 = vsyncpa [#allocation6], 1
    %s1267 = scalar_lea.sflag [#allocation6], 1
    %1268 = vsyncpa %s1267, 1
    %1269 = vsyncpa [#allocation7], 1
    %s1270 = scalar_lea.sflag [#allocation7], 1
    %1271 = vsyncpa %s1270, 1
    %1272 = vsyncpa [#allocation8], 1
    %s1273 = scalar_lea.sflag [#allocation8], 1
    %1274 = vsyncpa %s1273, 1

</llo_original>
